<compile_context>
chip_gen: v6e
topology: v6e:2x2x1
jax: 0.10.0
libtpu: 0.0.40
codegen_flags: <defaults>
</compile_context>

<pallas_src>
import jax
import jax.numpy as jnp
import numpy as np
from jax import lax
from jax.experimental import pallas as pl
from jax.experimental.pallas import tpu as pltpu

# Problem sizes: PolicyNetwork(input_shape=(H, W), output_shape=OUT), batch B.
B, H, W = 2, 16, 16
C = 16                  # conv1 out channels
HP, WP = H // 2, W // 2
S = HP * WP             # pooled spatial positions per channel (64)
BS = B * S              # lanes per pool parity slab (128)
NP = 4                  # 2x2 max-pool parities
FLAT = C * S            # 1024
HID = 256
OUT = 8


def policy_kernel(taps_ref, wc_ref, bc_ref, w1_hbm, b1_ref, w2_ref, b2_ref,
                  out_ref, flat_ref, w1_vmem, w1_sem):
    # Start the 512 KiB fc1-weight fetch immediately; it overlaps with the
    # conv/pool/relayout phase and is waited on just before the fc1 matmul.
    w1_copy = pltpu.make_async_copy(w1_hbm, w1_vmem, w1_sem)
    w1_copy.start()

    # ---- conv1 (3x3, pad=1) + bias + ReLU + 2x2 max-pool: one MXU matmul.
    m = jnp.dot(wc_ref[...], taps_ref[...],
                preferred_element_type=jnp.float32)            # (C, NP*BS)
    m = jnp.maximum(m + bc_ref[...], 0.0)
    # Pool parity max over four static, 128-lane-aligned slices.
    pooled = jnp.maximum(
        jnp.maximum(m[:, 0 * BS:1 * BS], m[:, 1 * BS:2 * BS]),
        jnp.maximum(m[:, 2 * BS:3 * BS], m[:, 3 * BS:4 * BS]))  # (C, B*S)

    # TODO(synk): nn.Dropout(0.2) is treated as eval-mode identity (no RNG mask).

    # ---- relayout (C, b*S+s) -> (B, c*S+s)  (torch's NCHW channel-major
    # flatten).  One XLU lane-rotate by S separates the two batches; each
    # (even, odd) channel pair is then one full, unmasked, 128-lane-aligned
    # store into the lane-dense staging buffer.
    rolled = pltpu.roll(pooled, shift=S, axis=1)       # row c: [b1(c) | b0(c)]
    lane = lax.broadcasted_iota(jnp.int32, (1, BS), 1)
    for k in range(C // 2):
        c0, c1 = 2 * k, 2 * k + 1
        flat_ref[0:1, 2 * S * k:2 * S * (k + 1)] = jnp.where(
            lane < S, pooled[c0:c0 + 1, :], rolled[c1:c1 + 1, :])
        flat_ref[1:2, 2 * S * k:2 * S * (k + 1)] = jnp.where(
            lane < S, rolled[c0:c0 + 1, :], pooled[c1:c1 + 1, :])
    flat = flat_ref[...]                                        # (B, FLAT)

    # ---- fc1: single (B,1024)@(1024,256) matmul, bf16 operands, f32 acc.
    w1_copy.wait()
    h1 = jnp.dot(flat.astype(jnp.bfloat16), w1_vmem[...],
                 preferred_element_type=jnp.float32) + b1_ref[...]
    h1 = jnp.maximum(h1, 0.0)

    # ---- fc2 + softmax(dim=1).  Exact divide: downstream REINFORCE takes
    # log-probs, and the divide is over 8 lanes (noise).
    logits = jnp.dot(h1.astype(jnp.bfloat16), w2_ref[...],
                     preferred_element_type=jnp.float32) + b2_ref[...]  # (B,OUT)
    mx = jnp.max(logits, axis=1, keepdims=True)
    e = jnp.exp(logits - mx)
    out_ref[...] = e / jnp.sum(e, axis=1, keepdims=True)


def build_taps(x):
    """im2col + pool-parity decomposition -> (9, NP*B*S), lane = p*BS + b*S + s.

    9 shifted windows of the padded input, one stack, one reshape, one
    transpose, one reshape — pure wrapper-side data movement XLA fuses into
    the kernel prologue.
    """
    xf = x.astype(jnp.float32)
    x_pad = jnp.pad(xf, ((0, 0), (1, 1), (1, 1)))                # (B, H+2, W+2)
    wins = jnp.stack([x_pad[:, di:di + H, dj:dj + W]
                      for di in range(3) for dj in range(3)], axis=0)  # (9,B,H,W)
    wins = wins.reshape(9, B, HP, 2, WP, 2)                      # [t,b,i,pi,j,pj]
    wins = wins.transpose(0, 3, 5, 1, 2, 4)                      # [t,pi,pj,b,i,j]
    return wins.reshape(9, NP * B * S)                           # lane = p*BS+b*S+s


def prepare_params(params):
    """One-time layout / dtype conversion (do NOT run per forward call)."""
    return dict(
        wc=params["w_conv"].reshape(C, 9).astype(jnp.float32),   # (C, 9)
        bc=params["b_conv"].reshape(C, 1).astype(jnp.float32),   # (C, 1)
        # torch flatten index = c*S + s  ->  fc1 weight stored as (FLAT, HID) bf16.
        w1=jnp.asarray(params["w_fc1"].T, dtype=jnp.bfloat16),   # (FLAT, HID)
        b1=params["b_fc1"].reshape(1, HID).astype(jnp.float32),
        w2=jnp.asarray(params["w_fc2"].T, dtype=jnp.bfloat16),   # (HID, OUT)
        b2=params["b_fc2"].reshape(1, OUT).astype(jnp.float32),
    )


@jax.jit
def policy_forward(x, prepped):
    taps = build_taps(x)                                         # (9, 512) f32
    vmem = pl.BlockSpec(memory_space=pltpu.MemorySpace.VMEM)
    hbm = pl.BlockSpec(memory_space=pl.ANY)                      # w1: manual DMA
    return pl.pallas_call(
        policy_kernel,
        out_shape=jax.ShapeDtypeStruct((B, OUT), jnp.float32),
        in_specs=[vmem, vmem, vmem, hbm, vmem, vmem, vmem],
        out_specs=vmem,
        scratch_shapes=[
            pltpu.VMEM((B, FLAT), jnp.float32),       # flat staging buffer
            pltpu.VMEM((FLAT, HID), jnp.bfloat16),    # resident w1 copy
            pltpu.SemaphoreType.DMA(()),              # w1 DMA completion
        ],
    )(taps, prepped["wc"], prepped["bc"], prepped["w1"],
      prepped["b1"], prepped["w2"], prepped["b2"])


def make_params(key):
    ks = jax.random.split(key, 6)
    return dict(
        w_conv=jax.random.normal(ks[0], (C, 1, 3, 3), jnp.float32) * 0.2,
        b_conv=jax.random.normal(ks[1], (C,), jnp.float32) * 0.1,
        w_fc1=jax.random.normal(ks[2], (HID, FLAT), jnp.float32) / np.sqrt(FLAT),
        b_fc1=jax.random.normal(ks[3], (HID,), jnp.float32) * 0.1,
        w_fc2=jax.random.normal(ks[4], (OUT, HID), jnp.float32) / np.sqrt(HID),
        b_fc2=jax.random.normal(ks[5], (OUT,), jnp.float32) * 0.1,
    )


def reference_forward(x, params):
    """Pure-JAX f32 reference matching the PyTorch forward (eval-mode dropout)."""
    xin = x.astype(jnp.float32)[:, None, :, :]                   # (B,1,H,W)
    conv = lax.conv_general_dilated(
        xin, params["w_conv"], window_strides=(1, 1),
        padding=((1, 1), (1, 1)),
        dimension_numbers=("NCHW", "OIHW", "NCHW"))
    conv = conv + params["b_conv"].reshape(1, C, 1, 1)
    r = jnp.maximum(conv, 0.0)
    pooled = lax.reduce_window(r, -jnp.inf, lax.max,
                               (1, 1, 2, 2), (1, 1, 2, 2), "VALID")
    flat = pooled.reshape(x.shape[0], -1)
    h1 = jnp.maximum(flat @ params["w_fc1"].T + params["b_fc1"], 0.0)
    logits = h1 @ params["w_fc2"].T + params["b_fc2"]
    return jax.nn.softmax(logits, axis=1)


if __name__ == "__main__":
    key = jax.random.PRNGKey(0)
    kx, kp = jax.random.split(key)
    x = jax.random.normal(kx, (B, H, W), jnp.float32)
    params = make_params(kp)

    # One-time weight layout / bf16 conversion (kept across calls).
    prepped = jax.block_until_ready(prepare_params(params))

    probs = policy_forward(x, prepped)
    probs = jax.block_until_ready(probs)

    ref = reference_forward(x, params)
    np.testing.assert_allclose(np.asarray(probs), np.asarray(ref),
                               atol=5e-3, rtol=5e-2)
    assert probs.shape == (B, OUT)
    print("KERNEL_OK")
</pallas_src>

<mosaic_0001>
module attributes {stable_mosaic.version = 11 : i64} {
  func.func @policy_kernel(%arg0: memref<9x512xf32, #tpu.memory_space<vmem>>, %arg1: memref<16x9xf32, #tpu.memory_space<vmem>>, %arg2: memref<16x1xf32, #tpu.memory_space<vmem>>, %arg3: memref<1024x256xbf16, #tpu.memory_space<any>>, %arg4: memref<1x256xf32, #tpu.memory_space<vmem>>, %arg5: memref<256x8xbf16, #tpu.memory_space<vmem>>, %arg6: memref<1x8xf32, #tpu.memory_space<vmem>>, %arg7: memref<2x8xf32, #tpu.memory_space<vmem>>, %arg8: memref<2x1024xf32, #tpu.memory_space<vmem>>, %arg9: memref<1024x256xbf16, #tpu.memory_space<vmem>>, %arg10: memref<!tpu.dma_semaphore, #tpu.memory_space<semaphore_mem>>) attributes {dimension_semantics = [], scalar_prefetch = 0 : i64, scratch_operands = 3 : i64, tpu.core_type = #tpu.core_type<tc>} {
    tpu.enqueue_dma source(%arg3 : memref<1024x256xbf16, #tpu.memory_space<any>>) target(%arg9 : memref<1024x256xbf16, #tpu.memory_space<vmem>>) target_semaphore(%arg10 : memref<!tpu.dma_semaphore, #tpu.memory_space<semaphore_mem>>)
    %c0 = arith.constant 0 : index
    %c0_0 = arith.constant 0 : index
    %0 = vector.load %arg1[%c0, %c0_0] : memref<16x9xf32, #tpu.memory_space<vmem>>, vector<16x9xf32>
    %c0_1 = arith.constant 0 : index
    %c0_2 = arith.constant 0 : index
    %1 = vector.load %arg0[%c0_1, %c0_2] : memref<9x512xf32, #tpu.memory_space<vmem>>, vector<9x512xf32>
    %cst = arith.constant dense<0.000000e+00> : vector<16x512xf32>
    %2 = tpu.matmul %0, %1, %cst {dimension_numbers = #tpu.dot_dimension_numbers<[1], [0], [0], [1], [0, 0, 1, 1], [], []>} : vector<16x9xf32>, vector<9x512xf32>, vector<16x512xf32> -> vector<16x512xf32>
    %c0_3 = arith.constant 0 : index
    %c0_4 = arith.constant 0 : index
    %3 = vector.load %arg2[%c0_3, %c0_4] : memref<16x1xf32, #tpu.memory_space<vmem>>, vector<16x1xf32>
    %4 = vector.broadcast %3 : vector<16x1xf32> to vector<16x512xf32>
    %5 = arith.addf %2, %4 : vector<16x512xf32>
    %cst_5 = arith.constant 0.000000e+00 : f32
    %6 = vector.broadcast %cst_5 : f32 to vector<16x512xf32>
    %7 = arith.maximumf %5, %6 : vector<16x512xf32>
    %8 = vector.extract_strided_slice %7 {offsets = [0, 0], sizes = [16, 128], strides = [1, 1]} : vector<16x512xf32> to vector<16x128xf32>
    %9 = vector.extract_strided_slice %7 {offsets = [0, 128], sizes = [16, 128], strides = [1, 1]} : vector<16x512xf32> to vector<16x128xf32>
    %10 = arith.maximumf %8, %9 : vector<16x128xf32>
    %11 = vector.extract_strided_slice %7 {offsets = [0, 256], sizes = [16, 128], strides = [1, 1]} : vector<16x512xf32> to vector<16x128xf32>
    %12 = vector.extract_strided_slice %7 {offsets = [0, 384], sizes = [16, 128], strides = [1, 1]} : vector<16x512xf32> to vector<16x128xf32>
    %13 = arith.maximumf %11, %12 : vector<16x128xf32>
    %14 = arith.maximumf %10, %13 : vector<16x128xf32>
    %c64_i32 = arith.constant 64 : i32
    %15 = tpu.dynamic_rotate %14 by %c64_i32 dim 1 : vector<16x128xf32>, i32 -> vector<16x128xf32>
    %16 = tpu.iota {dimensions = array<i32: 1>} : vector<1x128xi32>
    %c64_i32_6 = arith.constant 64 : i32
    %17 = vector.broadcast %c64_i32_6 : i32 to vector<1x128xi32>
    %18 = arith.cmpi slt, %16, %17 : vector<1x128xi32>
    %19 = vector.extract_strided_slice %14 {offsets = [0, 0], sizes = [1, 128], strides = [1, 1]} : vector<16x128xf32> to vector<1x128xf32>
    %20 = vector.extract_strided_slice %15 {offsets = [1, 0], sizes = [1, 128], strides = [1, 1]} : vector<16x128xf32> to vector<1x128xf32>
    %21 = arith.select %18, %19, %20 : vector<1x128xi1>, vector<1x128xf32>
    %c0_7 = arith.constant 0 : index
    %c0_8 = arith.constant 0 : index
    %22 = vector.load %arg8[%c0_7, %c0_8] : memref<2x1024xf32, #tpu.memory_space<vmem>>, vector<1x128xf32>
    tpu.vector_store %arg8[%c0_7, %c0_8], %21 {strides = array<i32>} : memref<2x1024xf32, #tpu.memory_space<vmem>>, vector<1x128xf32>,
    %c64_i32_9 = arith.constant 64 : i32
    %23 = vector.broadcast %c64_i32_9 : i32 to vector<1x128xi32>
    %24 = arith.cmpi slt, %16, %23 : vector<1x128xi32>
    %25 = vector.extract_strided_slice %15 {offsets = [0, 0], sizes = [1, 128], strides = [1, 1]} : vector<16x128xf32> to vector<1x128xf32>
    %26 = vector.extract_strided_slice %14 {offsets = [1, 0], sizes = [1, 128], strides = [1, 1]} : vector<16x128xf32> to vector<1x128xf32>
    %27 = arith.select %24, %25, %26 : vector<1x128xi1>, vector<1x128xf32>
    %c1 = arith.constant 1 : index
    %c0_10 = arith.constant 0 : index
    %28 = vector.load %arg8[%c1, %c0_10] : memref<2x1024xf32, #tpu.memory_space<vmem>>, vector<1x128xf32>
    tpu.vector_store %arg8[%c1, %c0_10], %27 {strides = array<i32>} : memref<2x1024xf32, #tpu.memory_space<vmem>>, vector<1x128xf32>,
    %c64_i32_11 = arith.constant 64 : i32
    %29 = vector.broadcast %c64_i32_11 : i32 to vector<1x128xi32>
    %30 = arith.cmpi slt, %16, %29 : vector<1x128xi32>
    %31 = vector.extract_strided_slice %14 {offsets = [2, 0], sizes = [1, 128], strides = [1, 1]} : vector<16x128xf32> to vector<1x128xf32>
    %32 = vector.extract_strided_slice %15 {offsets = [3, 0], sizes = [1, 128], strides = [1, 1]} : vector<16x128xf32> to vector<1x128xf32>
    %33 = arith.select %30, %31, %32 : vector<1x128xi1>, vector<1x128xf32>
    %c0_12 = arith.constant 0 : index
    %c128 = arith.constant 128 : index
    %34 = vector.load %arg8[%c0_12, %c128] : memref<2x1024xf32, #tpu.memory_space<vmem>>, vector<1x128xf32>
    tpu.vector_store %arg8[%c0_12, %c128], %33 {strides = array<i32>} : memref<2x1024xf32, #tpu.memory_space<vmem>>, vector<1x128xf32>,
    %c64_i32_13 = arith.constant 64 : i32
    %35 = vector.broadcast %c64_i32_13 : i32 to vector<1x128xi32>
    %36 = arith.cmpi slt, %16, %35 : vector<1x128xi32>
    %37 = vector.extract_strided_slice %15 {offsets = [2, 0], sizes = [1, 128], strides = [1, 1]} : vector<16x128xf32> to vector<1x128xf32>
    %38 = vector.extract_strided_slice %14 {offsets = [3, 0], sizes = [1, 128], strides = [1, 1]} : vector<16x128xf32> to vector<1x128xf32>
    %39 = arith.select %36, %37, %38 : vector<1x128xi1>, vector<1x128xf32>
    %c1_14 = arith.constant 1 : index
    %c128_15 = arith.constant 128 : index
    %40 = vector.load %arg8[%c1_14, %c128_15] : memref<2x1024xf32, #tpu.memory_space<vmem>>, vector<1x128xf32>
    tpu.vector_store %arg8[%c1_14, %c128_15], %39 {strides = array<i32>} : memref<2x1024xf32, #tpu.memory_space<vmem>>, vector<1x128xf32>,
    %c64_i32_16 = arith.constant 64 : i32
    %41 = vector.broadcast %c64_i32_16 : i32 to vector<1x128xi32>
    %42 = arith.cmpi slt, %16, %41 : vector<1x128xi32>
    %43 = vector.extract_strided_slice %14 {offsets = [4, 0], sizes = [1, 128], strides = [1, 1]} : vector<16x128xf32> to vector<1x128xf32>
    %44 = vector.extract_strided_slice %15 {offsets = [5, 0], sizes = [1, 128], strides = [1, 1]} : vector<16x128xf32> to vector<1x128xf32>
    %45 = arith.select %42, %43, %44 : vector<1x128xi1>, vector<1x128xf32>
    %c0_17 = arith.constant 0 : index
    %c256 = arith.constant 256 : index
    %46 = vector.load %arg8[%c0_17, %c256] : memref<2x1024xf32, #tpu.memory_space<vmem>>, vector<1x128xf32>
    tpu.vector_store %arg8[%c0_17, %c256], %45 {strides = array<i32>} : memref<2x1024xf32, #tpu.memory_space<vmem>>, vector<1x128xf32>,
    %c64_i32_18 = arith.constant 64 : i32
    %47 = vector.broadcast %c64_i32_18 : i32 to vector<1x128xi32>
    %48 = arith.cmpi slt, %16, %47 : vector<1x128xi32>
    %49 = vector.extract_strided_slice %15 {offsets = [4, 0], sizes = [1, 128], strides = [1, 1]} : vector<16x128xf32> to vector<1x128xf32>
    %50 = vector.extract_strided_slice %14 {offsets = [5, 0], sizes = [1, 128], strides = [1, 1]} : vector<16x128xf32> to vector<1x128xf32>
    %51 = arith.select %48, %49, %50 : vector<1x128xi1>, vector<1x128xf32>
    %c1_19 = arith.constant 1 : index
    %c256_20 = arith.constant 256 : index
    %52 = vector.load %arg8[%c1_19, %c256_20] : memref<2x1024xf32, #tpu.memory_space<vmem>>, vector<1x128xf32>
    tpu.vector_store %arg8[%c1_19, %c256_20], %51 {strides = array<i32>} : memref<2x1024xf32, #tpu.memory_space<vmem>>, vector<1x128xf32>,
    %c64_i32_21 = arith.constant 64 : i32
    %53 = vector.broadcast %c64_i32_21 : i32 to vector<1x128xi32>
    %54 = arith.cmpi slt, %16, %53 : vector<1x128xi32>
    %55 = vector.extract_strided_slice %14 {offsets = [6, 0], sizes = [1, 128], strides = [1, 1]} : vector<16x128xf32> to vector<1x128xf32>
    %56 = vector.extract_strided_slice %15 {offsets = [7, 0], sizes = [1, 128], strides = [1, 1]} : vector<16x128xf32> to vector<1x128xf32>
    %57 = arith.select %54, %55, %56 : vector<1x128xi1>, vector<1x128xf32>
    %c0_22 = arith.constant 0 : index
    %c384 = arith.constant 384 : index
    %58 = vector.load %arg8[%c0_22, %c384] : memref<2x1024xf32, #tpu.memory_space<vmem>>, vector<1x128xf32>
    tpu.vector_store %arg8[%c0_22, %c384], %57 {strides = array<i32>} : memref<2x1024xf32, #tpu.memory_space<vmem>>, vector<1x128xf32>,
    %c64_i32_23 = arith.constant 64 : i32
    %59 = vector.broadcast %c64_i32_23 : i32 to vector<1x128xi32>
    %60 = arith.cmpi slt, %16, %59 : vector<1x128xi32>
    %61 = vector.extract_strided_slice %15 {offsets = [6, 0], sizes = [1, 128], strides = [1, 1]} : vector<16x128xf32> to vector<1x128xf32>
    %62 = vector.extract_strided_slice %14 {offsets = [7, 0], sizes = [1, 128], strides = [1, 1]} : vector<16x128xf32> to vector<1x128xf32>
    %63 = arith.select %60, %61, %62 : vector<1x128xi1>, vector<1x128xf32>
    %c1_24 = arith.constant 1 : index
    %c384_25 = arith.constant 384 : index
    %64 = vector.load %arg8[%c1_24, %c384_25] : memref<2x1024xf32, #tpu.memory_space<vmem>>, vector<1x128xf32>
    tpu.vector_store %arg8[%c1_24, %c384_25], %63 {strides = array<i32>} : memref<2x1024xf32, #tpu.memory_space<vmem>>, vector<1x128xf32>,
    %c64_i32_26 = arith.constant 64 : i32
    %65 = vector.broadcast %c64_i32_26 : i32 to vector<1x128xi32>
    %66 = arith.cmpi slt, %16, %65 : vector<1x128xi32>
    %67 = vector.extract_strided_slice %14 {offsets = [8, 0], sizes = [1, 128], strides = [1, 1]} : vector<16x128xf32> to vector<1x128xf32>
    %68 = vector.extract_strided_slice %15 {offsets = [9, 0], sizes = [1, 128], strides = [1, 1]} : vector<16x128xf32> to vector<1x128xf32>
    %69 = arith.select %66, %67, %68 : vector<1x128xi1>, vector<1x128xf32>
    %c0_27 = arith.constant 0 : index
    %c512 = arith.constant 512 : index
    %70 = vector.load %arg8[%c0_27, %c512] : memref<2x1024xf32, #tpu.memory_space<vmem>>, vector<1x128xf32>
    tpu.vector_store %arg8[%c0_27, %c512], %69 {strides = array<i32>} : memref<2x1024xf32, #tpu.memory_space<vmem>>, vector<1x128xf32>,
    %c64_i32_28 = arith.constant 64 : i32
    %71 = vector.broadcast %c64_i32_28 : i32 to vector<1x128xi32>
    %72 = arith.cmpi slt, %16, %71 : vector<1x128xi32>
    %73 = vector.extract_strided_slice %15 {offsets = [8, 0], sizes = [1, 128], strides = [1, 1]} : vector<16x128xf32> to vector<1x128xf32>
    %74 = vector.extract_strided_slice %14 {offsets = [9, 0], sizes = [1, 128], strides = [1, 1]} : vector<16x128xf32> to vector<1x128xf32>
    %75 = arith.select %72, %73, %74 : vector<1x128xi1>, vector<1x128xf32>
    %c1_29 = arith.constant 1 : index
    %c512_30 = arith.constant 512 : index
    %76 = vector.load %arg8[%c1_29, %c512_30] : memref<2x1024xf32, #tpu.memory_space<vmem>>, vector<1x128xf32>
    tpu.vector_store %arg8[%c1_29, %c512_30], %75 {strides = array<i32>} : memref<2x1024xf32, #tpu.memory_space<vmem>>, vector<1x128xf32>,
    %c64_i32_31 = arith.constant 64 : i32
    %77 = vector.broadcast %c64_i32_31 : i32 to vector<1x128xi32>
    %78 = arith.cmpi slt, %16, %77 : vector<1x128xi32>
    %79 = vector.extract_strided_slice %14 {offsets = [10, 0], sizes = [1, 128], strides = [1, 1]} : vector<16x128xf32> to vector<1x128xf32>
    %80 = vector.extract_strided_slice %15 {offsets = [11, 0], sizes = [1, 128], strides = [1, 1]} : vector<16x128xf32> to vector<1x128xf32>
    %81 = arith.select %78, %79, %80 : vector<1x128xi1>, vector<1x128xf32>
    %c0_32 = arith.constant 0 : index
    %c640 = arith.constant 640 : index
    %82 = vector.load %arg8[%c0_32, %c640] : memref<2x1024xf32, #tpu.memory_space<vmem>>, vector<1x128xf32>
    tpu.vector_store %arg8[%c0_32, %c640], %81 {strides = array<i32>} : memref<2x1024xf32, #tpu.memory_space<vmem>>, vector<1x128xf32>,
    %c64_i32_33 = arith.constant 64 : i32
    %83 = vector.broadcast %c64_i32_33 : i32 to vector<1x128xi32>
    %84 = arith.cmpi slt, %16, %83 : vector<1x128xi32>
    %85 = vector.extract_strided_slice %15 {offsets = [10, 0], sizes = [1, 128], strides = [1, 1]} : vector<16x128xf32> to vector<1x128xf32>
    %86 = vector.extract_strided_slice %14 {offsets = [11, 0], sizes = [1, 128], strides = [1, 1]} : vector<16x128xf32> to vector<1x128xf32>
    %87 = arith.select %84, %85, %86 : vector<1x128xi1>, vector<1x128xf32>
    %c1_34 = arith.constant 1 : index
    %c640_35 = arith.constant 640 : index
    %88 = vector.load %arg8[%c1_34, %c640_35] : memref<2x1024xf32, #tpu.memory_space<vmem>>, vector<1x128xf32>
    tpu.vector_store %arg8[%c1_34, %c640_35], %87 {strides = array<i32>} : memref<2x1024xf32, #tpu.memory_space<vmem>>, vector<1x128xf32>,
    %c64_i32_36 = arith.constant 64 : i32
    %89 = vector.broadcast %c64_i32_36 : i32 to vector<1x128xi32>
    %90 = arith.cmpi slt, %16, %89 : vector<1x128xi32>
    %91 = vector.extract_strided_slice %14 {offsets = [12, 0], sizes = [1, 128], strides = [1, 1]} : vector<16x128xf32> to vector<1x128xf32>
    %92 = vector.extract_strided_slice %15 {offsets = [13, 0], sizes = [1, 128], strides = [1, 1]} : vector<16x128xf32> to vector<1x128xf32>
    %93 = arith.select %90, %91, %92 : vector<1x128xi1>, vector<1x128xf32>
    %c0_37 = arith.constant 0 : index
    %c768 = arith.constant 768 : index
    %94 = vector.load %arg8[%c0_37, %c768] : memref<2x1024xf32, #tpu.memory_space<vmem>>, vector<1x128xf32>
    tpu.vector_store %arg8[%c0_37, %c768], %93 {strides = array<i32>} : memref<2x1024xf32, #tpu.memory_space<vmem>>, vector<1x128xf32>,
    %c64_i32_38 = arith.constant 64 : i32
    %95 = vector.broadcast %c64_i32_38 : i32 to vector<1x128xi32>
    %96 = arith.cmpi slt, %16, %95 : vector<1x128xi32>
    %97 = vector.extract_strided_slice %15 {offsets = [12, 0], sizes = [1, 128], strides = [1, 1]} : vector<16x128xf32> to vector<1x128xf32>
    %98 = vector.extract_strided_slice %14 {offsets = [13, 0], sizes = [1, 128], strides = [1, 1]} : vector<16x128xf32> to vector<1x128xf32>
    %99 = arith.select %96, %97, %98 : vector<1x128xi1>, vector<1x128xf32>
    %c1_39 = arith.constant 1 : index
    %c768_40 = arith.constant 768 : index
    %100 = vector.load %arg8[%c1_39, %c768_40] : memref<2x1024xf32, #tpu.memory_space<vmem>>, vector<1x128xf32>
    tpu.vector_store %arg8[%c1_39, %c768_40], %99 {strides = array<i32>} : memref<2x1024xf32, #tpu.memory_space<vmem>>, vector<1x128xf32>,
    %c64_i32_41 = arith.constant 64 : i32
    %101 = vector.broadcast %c64_i32_41 : i32 to vector<1x128xi32>
    %102 = arith.cmpi slt, %16, %101 : vector<1x128xi32>
    %103 = vector.extract_strided_slice %14 {offsets = [14, 0], sizes = [1, 128], strides = [1, 1]} : vector<16x128xf32> to vector<1x128xf32>
    %104 = vector.extract_strided_slice %15 {offsets = [15, 0], sizes = [1, 128], strides = [1, 1]} : vector<16x128xf32> to vector<1x128xf32>
    %105 = arith.select %102, %103, %104 : vector<1x128xi1>, vector<1x128xf32>
    %c0_42 = arith.constant 0 : index
    %c896 = arith.constant 896 : index
    %106 = vector.load %arg8[%c0_42, %c896] : memref<2x1024xf32, #tpu.memory_space<vmem>>, vector<1x128xf32>
    tpu.vector_store %arg8[%c0_42, %c896], %105 {strides = array<i32>} : memref<2x1024xf32, #tpu.memory_space<vmem>>, vector<1x128xf32>,
    %c64_i32_43 = arith.constant 64 : i32
    %107 = vector.broadcast %c64_i32_43 : i32 to vector<1x128xi32>
    %108 = arith.cmpi slt, %16, %107 : vector<1x128xi32>
    %109 = vector.extract_strided_slice %15 {offsets = [14, 0], sizes = [1, 128], strides = [1, 1]} : vector<16x128xf32> to vector<1x128xf32>
    %110 = vector.extract_strided_slice %14 {offsets = [15, 0], sizes = [1, 128], strides = [1, 1]} : vector<16x128xf32> to vector<1x128xf32>
    %111 = arith.select %108, %109, %110 : vector<1x128xi1>, vector<1x128xf32>
    %c1_44 = arith.constant 1 : index
    %c896_45 = arith.constant 896 : index
    %112 = vector.load %arg8[%c1_44, %c896_45] : memref<2x1024xf32, #tpu.memory_space<vmem>>, vector<1x128xf32>
    tpu.vector_store %arg8[%c1_44, %c896_45], %111 {strides = array<i32>} : memref<2x1024xf32, #tpu.memory_space<vmem>>, vector<1x128xf32>,
    %c0_46 = arith.constant 0 : index
    %c0_47 = arith.constant 0 : index
    %113 = vector.load %arg8[%c0_46, %c0_47] : memref<2x1024xf32, #tpu.memory_space<vmem>>, vector<2x1024xf32>
    tpu.wait_dma2 semaphore(%arg10 : memref<!tpu.dma_semaphore, #tpu.memory_space<semaphore_mem>>) src(%arg3 : memref<1024x256xbf16, #tpu.memory_space<any>>) dst(%arg9 : memref<1024x256xbf16, #tpu.memory_space<vmem>>)
    %114 = arith.truncf %113 : vector<2x1024xf32> to vector<2x1024xbf16>
    %c0_48 = arith.constant 0 : index
    %c0_49 = arith.constant 0 : index
    %115 = vector.load %arg9[%c0_48, %c0_49] : memref<1024x256xbf16, #tpu.memory_space<vmem>>, vector<1024x256xbf16>
    %cst_50 = arith.constant dense<0.000000e+00> : vector<2x256xf32>
    %116 = tpu.matmul %114, %115, %cst_50 {dimension_numbers = #tpu.dot_dimension_numbers<[1], [0], [0], [1], [0, 0, 1, 1], [], []>} : vector<2x1024xbf16>, vector<1024x256xbf16>, vector<2x256xf32> -> vector<2x256xf32>
    %c0_51 = arith.constant 0 : index
    %c0_52 = arith.constant 0 : index
    %117 = vector.load %arg4[%c0_51, %c0_52] : memref<1x256xf32, #tpu.memory_space<vmem>>, vector<1x256xf32>
    %118 = vector.broadcast %117 : vector<1x256xf32> to vector<2x256xf32>
    %119 = arith.addf %116, %118 : vector<2x256xf32>
    %cst_53 = arith.constant 0.000000e+00 : f32
    %120 = vector.broadcast %cst_53 : f32 to vector<2x256xf32>
    %121 = arith.maximumf %119, %120 : vector<2x256xf32>
    %122 = arith.truncf %121 : vector<2x256xf32> to vector<2x256xbf16>
    %c0_54 = arith.constant 0 : index
    %c0_55 = arith.constant 0 : index
    %123 = vector.load %arg5[%c0_54, %c0_55] : memref<256x8xbf16, #tpu.memory_space<vmem>>, vector<256x8xbf16>
    %cst_56 = arith.constant dense<0.000000e+00> : vector<2x8xf32>
    %124 = tpu.matmul %122, %123, %cst_56 {dimension_numbers = #tpu.dot_dimension_numbers<[1], [0], [0], [1], [0, 0, 1, 1], [], []>} : vector<2x256xbf16>, vector<256x8xbf16>, vector<2x8xf32> -> vector<2x8xf32>
    %c0_57 = arith.constant 0 : index
    %c0_58 = arith.constant 0 : index
    %125 = vector.load %arg6[%c0_57, %c0_58] : memref<1x8xf32, #tpu.memory_space<vmem>>, vector<1x8xf32>
    %126 = vector.broadcast %125 : vector<1x8xf32> to vector<2x8xf32>
    %127 = arith.addf %124, %126 : vector<2x8xf32>
    %cst_59 = arith.constant dense<0xFF800000> : vector<2xf32>
    %128 = vector.multi_reduction <maximumf>, %127, %cst_59 [1] : vector<2x8xf32> to vector<2xf32>
    %129 = vector.shape_cast %128 : vector<2xf32> to vector<2x1xf32>
    %130 = vector.broadcast %129 : vector<2x1xf32> to vector<2x8xf32>
    %131 = arith.subf %127, %130 : vector<2x8xf32>
    %132 = math.exp %131 : vector<2x8xf32>
    %cst_60 = arith.constant dense<0.000000e+00> : vector<2xf32>
    %133 = vector.multi_reduction <add>, %132, %cst_60 [1] : vector<2x8xf32> to vector<2xf32>
    %134 = vector.shape_cast %133 : vector<2xf32> to vector<2x1xf32>
    %135 = vector.broadcast %134 : vector<2x1xf32> to vector<2x8xf32>
    %136 = arith.divf %132, %135 : vector<2x8xf32>
    %c0_61 = arith.constant 0 : index
    %c0_62 = arith.constant 0 : index
    %137 = vector.load %arg7[%c0_61, %c0_62] : memref<2x8xf32, #tpu.memory_space<vmem>>, vector<2x8xf32>
    tpu.vector_store %arg7[%c0_61, %c0_62], %136 {strides = array<i32>} : memref<2x8xf32, #tpu.memory_space<vmem>>, vector<2x8xf32>,
    return
  }
}

</mosaic_0001>

<llo_original>
// kernel: policy_forward.1
$region0: #{policy_forward.1}
  #allocation0 [shape = 'u32[]', space=smem, size = 0x4, offset = 0x4, fixed_abs, tag = 'smem constant byte address 0x4 - core index']
  #allocation1 [shape = 'u32[144,128]{1,0:T(1,128)}', space=vmem, size = 0x12000, scoped, tag = 'internal scratch']
  #allocation2 [shape = 'f32[2,1024]{1,0:T(2,128)}', space=vmem, size = 0x2000, scoped, tag = 'scratch operand']
  #allocation3 [shape = 'bf16[1024,256]{1,0:T(8,128)(2,1)}', space=vmem, size = 0x80000, scoped, tag = 'scratch operand']
  #allocation4 [shape = 's32[1]{0}', space=sflag, size = 0x4, scoped, tag = 'scratch operand']
  #allocation7 [shape = 's32[]', space=sflag, size = 0x4, offset = 0, fixed_abs, tag = 'sflag constant byte address 0x0 - dummy sync flag']
  %s0 = inlined_call_operand.vmem [shape: f32[9,512], index: 0, kind: input, shape index: {}]
  %s1 = inlined_call_operand.vmem [shape: f32[16,9], index: 1, kind: input, shape index: {}]
  %s2 = inlined_call_operand.vmem [shape: f32[16,1], index: 2, kind: input, shape index: {}]
  %s3 = inlined_call_operand.vmem [shape: bf16[1024,256], index: 3, kind: input, shape index: {}]
  %s4 = inlined_call_operand.vmem [shape: f32[1,256], index: 4, kind: input, shape index: {}]
  %s5 = inlined_call_operand.vmem [shape: bf16[256,8], index: 5, kind: input, shape index: {}]
  %s6 = inlined_call_operand.vmem [shape: f32[1,8], index: 6, kind: input, shape index: {}]
  %s7 = inlined_call_operand.hbm [shape: f32[2,8], index: 7, kind: output, shape index: {}]
  %s8 = sld [smem:[#allocation0]]
  $region68: #{policy_forward.1} parent=0
    _
  %s10 = ssub.s32 1, %s8
  %s11 = scalar_select 0, %s10, %s8
  $region1: #{policy_forward.1} parent=0
    #allocation5 [shape = 'u8[1024]{0}', space=vmem, size = 0x400, scoped, tag = 'output window, operand 0, single buffered']
    #allocation6 [shape = 's32[1]{0}', space=sflag, size = 0x4, scoped, tag = 'scoped memory for policy_forward.1']
    %12 = vsyncpa [#allocation6], 0
    // Predicated region
    $region2: #{policy_forward.1} parent=1 // pred_check
      _
    $region3: #{policy_forward.1} parent=1 // pred_check_branch
      %14 = sbr.rel (0) target = $region5
    $region4: #{policy_forward.1} parent=1 // pred_region
      _
    $region5: #{policy_forward.1} parent=1 // pred_fallthru
      _
    // Predicated region
    $region6: #{policy_forward.1} parent=1 // pred_check
      _
    $region7: #{policy_forward.1} parent=1 // pred_check_branch
      %16 = sbr.rel (0) target = $region9
    $region8: #{policy_forward.1} parent=1 // pred_region
      _
    $region9: #{policy_forward.1} parent=1 // pred_fallthru
      _
    // Predicated region
    $region10: #{policy_forward.1} parent=1 // pred_check
      _
    $region11: #{policy_forward.1} parent=1 // pred_check_branch
      %18 = sbr.rel (0) target = $region13
    $region12: #{policy_forward.1} parent=1 // pred_region
      _
    $region13: #{policy_forward.1} parent=1 // pred_fallthru
      _
    // Predicated region
    $region14: #{policy_forward.1} parent=1 // pred_check
      _
    $region15: #{policy_forward.1} parent=1 // pred_check_branch
      %20 = sbr.rel (0) target = $region17
    $region16: #{policy_forward.1} parent=1 // pred_region
      _
    $region17: #{policy_forward.1} parent=1 // pred_fallthru
      _
    // Predicated region
    $region18: #{policy_forward.1} parent=1 // pred_check
      _
    $region19: #{policy_forward.1} parent=1 // pred_check_branch
      %22 = sbr.rel (0) target = $region21
    $region20: #{policy_forward.1} parent=1 // pred_region
      _
    $region21: #{policy_forward.1} parent=1 // pred_fallthru
      _
    // Predicated region
    $region22: #{policy_forward.1} parent=1 // pred_check
      _
    $region23: #{policy_forward.1} parent=1 // pred_check_branch
      %24 = sbr.rel (0) target = $region25
    $region24: #{policy_forward.1} parent=1 // pred_region
      _
    $region25: #{policy_forward.1} parent=1 // pred_fallthru
      _
    %p27 = scmp.lt.u32.totalorder 1024, 8
    %p28 = pneg %p27
    // Predicated region
    $region26: #{policy_forward.1} parent=1 // pred_check
      _
    $region27: #{policy_forward.1} parent=1 // pred_check_branch
      %30 = sbr.rel (%p27) target = $region29
    $region28: #{policy_forward.1} parent=1 // pred_region
      %s46 = sand.u32 1024, 7
      %p47 = scmp.eq.s32.totalorder %s46, 0
      // Predicated region
      $region41: #{policy_forward.1} parent=28 // pred_check
        %p48 = pneg %p47
      $region42: #{policy_forward.1} parent=28 // pred_check_branch
        %50 = sbr.rel (%p48) target = $region44
      $region43: #{policy_forward.1} parent=28 // pred_region
        loop: start=0, step=1, limit=1
        $region45: #{policy_forward.1} parent=43 // loop_pre_header
          _
        $region46: #{policy_forward.1} parent=43 // loop_header
          %s52 = sphi 0, %s56
          %p53 = scmp.ge.s32.totalorder %s52, 1
          %s57 = sphi %s3, %s3
          %s58 = sphi [#allocation3], [#allocation3]
        $region47: #{policy_forward.1} parent=43 // loop_header_branch
          %55 = sbr.rel (%p53) target = $region51
        $region48: #{policy_forward.1} parent=43 // loop_body
          %v59 = vld [vmem:[%s57] sm:$0xff]
          %60 = vst [vmem:[%s58] sm:$0xff] %v59
          %v61 = vld [vmem:[%s57 + $0x8] sm:$0xff]
          %62 = vst [vmem:[%s58 + $0x8] sm:$0xff] %v61
          %v63 = vld [vmem:[%s57 + $0x10] sm:$0xff]
          %64 = vst [vmem:[%s58 + $0x10] sm:$0xff] %v63
          %v65 = vld [vmem:[%s57 + $0x18] sm:$0xff]
          %66 = vst [vmem:[%s58 + $0x18] sm:$0xff] %v65
          %v67 = vld [vmem:[%s57 + $0x20] sm:$0xff]
          %68 = vst [vmem:[%s58 + $0x20] sm:$0xff] %v67
          %v69 = vld [vmem:[%s57 + $0x28] sm:$0xff]
          %70 = vst [vmem:[%s58 + $0x28] sm:$0xff] %v69
          %v71 = vld [vmem:[%s57 + $0x30] sm:$0xff]
          %72 = vst [vmem:[%s58 + $0x30] sm:$0xff] %v71
          %v73 = vld [vmem:[%s57 + $0x38] sm:$0xff]
          %74 = vst [vmem:[%s58 + $0x38] sm:$0xff] %v73
          %v75 = vld [vmem:[%s57 + $0x40] sm:$0xff]
          %76 = vst [vmem:[%s58 + $0x40] sm:$0xff] %v75
          %v77 = vld [vmem:[%s57 + $0x48] sm:$0xff]
          %78 = vst [vmem:[%s58 + $0x48] sm:$0xff] %v77
          %v79 = vld [vmem:[%s57 + $0x50] sm:$0xff]
          %80 = vst [vmem:[%s58 + $0x50] sm:$0xff] %v79
          %v81 = vld [vmem:[%s57 + $0x58] sm:$0xff]
          %82 = vst [vmem:[%s58 + $0x58] sm:$0xff] %v81
          %v83 = vld [vmem:[%s57 + $0x60] sm:$0xff]
          %84 = vst [vmem:[%s58 + $0x60] sm:$0xff] %v83
          %v85 = vld [vmem:[%s57 + $0x68] sm:$0xff]
          %86 = vst [vmem:[%s58 + $0x68] sm:$0xff] %v85
          %v87 = vld [vmem:[%s57 + $0x70] sm:$0xff]
          %88 = vst [vmem:[%s58 + $0x70] sm:$0xff] %v87
          %v89 = vld [vmem:[%s57 + $0x78] sm:$0xff]
          %90 = vst [vmem:[%s58 + $0x78] sm:$0xff] %v89
          %v91 = vld [vmem:[%s57 + $0x80] sm:$0xff]
          %92 = vst [vmem:[%s58 + $0x80] sm:$0xff] %v91
          %v93 = vld [vmem:[%s57 + $0x88] sm:$0xff]
          %94 = vst [vmem:[%s58 + $0x88] sm:$0xff] %v93
          %v95 = vld [vmem:[%s57 + $0x90] sm:$0xff]
          %96 = vst [vmem:[%s58 + $0x90] sm:$0xff] %v95
          %v97 = vld [vmem:[%s57 + $0x98] sm:$0xff]
          %98 = vst [vmem:[%s58 + $0x98] sm:$0xff] %v97
          %v99 = vld [vmem:[%s57 + $0xa0] sm:$0xff]
          %100 = vst [vmem:[%s58 + $0xa0] sm:$0xff] %v99
          %v101 = vld [vmem:[%s57 + $0xa8] sm:$0xff]
          %102 = vst [vmem:[%s58 + $0xa8] sm:$0xff] %v101
          %v103 = vld [vmem:[%s57 + $0xb0] sm:$0xff]
          %104 = vst [vmem:[%s58 + $0xb0] sm:$0xff] %v103
          %v105 = vld [vmem:[%s57 + $0xb8] sm:$0xff]
          %106 = vst [vmem:[%s58 + $0xb8] sm:$0xff] %v105
          %v107 = vld [vmem:[%s57 + $0xc0] sm:$0xff]
          %108 = vst [vmem:[%s58 + $0xc0] sm:$0xff] %v107
          %v109 = vld [vmem:[%s57 + $0xc8] sm:$0xff]
          %110 = vst [vmem:[%s58 + $0xc8] sm:$0xff] %v109
          %v111 = vld [vmem:[%s57 + $0xd0] sm:$0xff]
          %112 = vst [vmem:[%s58 + $0xd0] sm:$0xff] %v111
          %v113 = vld [vmem:[%s57 + $0xd8] sm:$0xff]
          %114 = vst [vmem:[%s58 + $0xd8] sm:$0xff] %v113
          %v115 = vld [vmem:[%s57 + $0xe0] sm:$0xff]
          %116 = vst [vmem:[%s58 + $0xe0] sm:$0xff] %v115
          %v117 = vld [vmem:[%s57 + $0xe8] sm:$0xff]
          %118 = vst [vmem:[%s58 + $0xe8] sm:$0xff] %v117
          %v119 = vld [vmem:[%s57 + $0xf0] sm:$0xff]
          %120 = vst [vmem:[%s58 + $0xf0] sm:$0xff] %v119
          %v121 = vld [vmem:[%s57 + $0xf8] sm:$0xff]
          %122 = vst [vmem:[%s58 + $0xf8] sm:$0xff] %v121
          %v123 = vld [vmem:[%s57 + $0x100] sm:$0xff]
          %124 = vst [vmem:[%s58 + $0x100] sm:$0xff] %v123
          %v125 = vld [vmem:[%s57 + $0x108] sm:$0xff]
          %126 = vst [vmem:[%s58 + $0x108] sm:$0xff] %v125
          %v127 = vld [vmem:[%s57 + $0x110] sm:$0xff]
          %128 = vst [vmem:[%s58 + $0x110] sm:$0xff] %v127
          %v129 = vld [vmem:[%s57 + $0x118] sm:$0xff]
          %130 = vst [vmem:[%s58 + $0x118] sm:$0xff] %v129
          %v131 = vld [vmem:[%s57 + $0x120] sm:$0xff]
          %132 = vst [vmem:[%s58 + $0x120] sm:$0xff] %v131
          %v133 = vld [vmem:[%s57 + $0x128] sm:$0xff]
          %134 = vst [vmem:[%s58 + $0x128] sm:$0xff] %v133
          %v135 = vld [vmem:[%s57 + $0x130] sm:$0xff]
          %136 = vst [vmem:[%s58 + $0x130] sm:$0xff] %v135
          %v137 = vld [vmem:[%s57 + $0x138] sm:$0xff]
          %138 = vst [vmem:[%s58 + $0x138] sm:$0xff] %v137
          %v139 = vld [vmem:[%s57 + $0x140] sm:$0xff]
          %140 = vst [vmem:[%s58 + $0x140] sm:$0xff] %v139
          %v141 = vld [vmem:[%s57 + $0x148] sm:$0xff]
          %142 = vst [vmem:[%s58 + $0x148] sm:$0xff] %v141
          %v143 = vld [vmem:[%s57 + $0x150] sm:$0xff]
          %144 = vst [vmem:[%s58 + $0x150] sm:$0xff] %v143
          %v145 = vld [vmem:[%s57 + $0x158] sm:$0xff]
          %146 = vst [vmem:[%s58 + $0x158] sm:$0xff] %v145
          %v147 = vld [vmem:[%s57 + $0x160] sm:$0xff]
          %148 = vst [vmem:[%s58 + $0x160] sm:$0xff] %v147
          %v149 = vld [vmem:[%s57 + $0x168] sm:$0xff]
          %150 = vst [vmem:[%s58 + $0x168] sm:$0xff] %v149
          %v151 = vld [vmem:[%s57 + $0x170] sm:$0xff]
          %152 = vst [vmem:[%s58 + $0x170] sm:$0xff] %v151
          %v153 = vld [vmem:[%s57 + $0x178] sm:$0xff]
          %154 = vst [vmem:[%s58 + $0x178] sm:$0xff] %v153
          %v155 = vld [vmem:[%s57 + $0x180] sm:$0xff]
          %156 = vst [vmem:[%s58 + $0x180] sm:$0xff] %v155
          %v157 = vld [vmem:[%s57 + $0x188] sm:$0xff]
          %158 = vst [vmem:[%s58 + $0x188] sm:$0xff] %v157
          %v159 = vld [vmem:[%s57 + $0x190] sm:$0xff]
          %160 = vst [vmem:[%s58 + $0x190] sm:$0xff] %v159
          %v161 = vld [vmem:[%s57 + $0x198] sm:$0xff]
          %162 = vst [vmem:[%s58 + $0x198] sm:$0xff] %v161
          %v163 = vld [vmem:[%s57 + $0x1a0] sm:$0xff]
          %164 = vst [vmem:[%s58 + $0x1a0] sm:$0xff] %v163
          %v165 = vld [vmem:[%s57 + $0x1a8] sm:$0xff]
          %166 = vst [vmem:[%s58 + $0x1a8] sm:$0xff] %v165
          %v167 = vld [vmem:[%s57 + $0x1b0] sm:$0xff]
          %168 = vst [vmem:[%s58 + $0x1b0] sm:$0xff] %v167
          %v169 = vld [vmem:[%s57 + $0x1b8] sm:$0xff]
          %170 = vst [vmem:[%s58 + $0x1b8] sm:$0xff] %v169
          %v171 = vld [vmem:[%s57 + $0x1c0] sm:$0xff]
          %172 = vst [vmem:[%s58 + $0x1c0] sm:$0xff] %v171
          %v173 = vld [vmem:[%s57 + $0x1c8] sm:$0xff]
          %174 = vst [vmem:[%s58 + $0x1c8] sm:$0xff] %v173
          %v175 = vld [vmem:[%s57 + $0x1d0] sm:$0xff]
          %176 = vst [vmem:[%s58 + $0x1d0] sm:$0xff] %v175
          %v177 = vld [vmem:[%s57 + $0x1d8] sm:$0xff]
          %178 = vst [vmem:[%s58 + $0x1d8] sm:$0xff] %v177
          %v179 = vld [vmem:[%s57 + $0x1e0] sm:$0xff]
          %180 = vst [vmem:[%s58 + $0x1e0] sm:$0xff] %v179
          %v181 = vld [vmem:[%s57 + $0x1e8] sm:$0xff]
          %182 = vst [vmem:[%s58 + $0x1e8] sm:$0xff] %v181
          %v183 = vld [vmem:[%s57 + $0x1f0] sm:$0xff]
          %184 = vst [vmem:[%s58 + $0x1f0] sm:$0xff] %v183
          %v185 = vld [vmem:[%s57 + $0x1f8] sm:$0xff]
          %186 = vst [vmem:[%s58 + $0x1f8] sm:$0xff] %v185
          %v187 = vld [vmem:[%s57 + $0x200] sm:$0xff]
          %188 = vst [vmem:[%s58 + $0x200] sm:$0xff] %v187
          %v189 = vld [vmem:[%s57 + $0x208] sm:$0xff]
          %190 = vst [vmem:[%s58 + $0x208] sm:$0xff] %v189
          %v191 = vld [vmem:[%s57 + $0x210] sm:$0xff]
          %192 = vst [vmem:[%s58 + $0x210] sm:$0xff] %v191
          %v193 = vld [vmem:[%s57 + $0x218] sm:$0xff]
          %194 = vst [vmem:[%s58 + $0x218] sm:$0xff] %v193
          %v195 = vld [vmem:[%s57 + $0x220] sm:$0xff]
          %196 = vst [vmem:[%s58 + $0x220] sm:$0xff] %v195
          %v197 = vld [vmem:[%s57 + $0x228] sm:$0xff]
          %198 = vst [vmem:[%s58 + $0x228] sm:$0xff] %v197
          %v199 = vld [vmem:[%s57 + $0x230] sm:$0xff]
          %200 = vst [vmem:[%s58 + $0x230] sm:$0xff] %v199
          %v201 = vld [vmem:[%s57 + $0x238] sm:$0xff]
          %202 = vst [vmem:[%s58 + $0x238] sm:$0xff] %v201
          %v203 = vld [vmem:[%s57 + $0x240] sm:$0xff]
          %204 = vst [vmem:[%s58 + $0x240] sm:$0xff] %v203
          %v205 = vld [vmem:[%s57 + $0x248] sm:$0xff]
          %206 = vst [vmem:[%s58 + $0x248] sm:$0xff] %v205
          %v207 = vld [vmem:[%s57 + $0x250] sm:$0xff]
          %208 = vst [vmem:[%s58 + $0x250] sm:$0xff] %v207
          %v209 = vld [vmem:[%s57 + $0x258] sm:$0xff]
          %210 = vst [vmem:[%s58 + $0x258] sm:$0xff] %v209
          %v211 = vld [vmem:[%s57 + $0x260] sm:$0xff]
          %212 = vst [vmem:[%s58 + $0x260] sm:$0xff] %v211
          %v213 = vld [vmem:[%s57 + $0x268] sm:$0xff]
          %214 = vst [vmem:[%s58 + $0x268] sm:$0xff] %v213
          %v215 = vld [vmem:[%s57 + $0x270] sm:$0xff]
          %216 = vst [vmem:[%s58 + $0x270] sm:$0xff] %v215
          %v217 = vld [vmem:[%s57 + $0x278] sm:$0xff]
          %218 = vst [vmem:[%s58 + $0x278] sm:$0xff] %v217
          %v219 = vld [vmem:[%s57 + $0x280] sm:$0xff]
          %220 = vst [vmem:[%s58 + $0x280] sm:$0xff] %v219
          %v221 = vld [vmem:[%s57 + $0x288] sm:$0xff]
          %222 = vst [vmem:[%s58 + $0x288] sm:$0xff] %v221
          %v223 = vld [vmem:[%s57 + $0x290] sm:$0xff]
          %224 = vst [vmem:[%s58 + $0x290] sm:$0xff] %v223
          %v225 = vld [vmem:[%s57 + $0x298] sm:$0xff]
          %226 = vst [vmem:[%s58 + $0x298] sm:$0xff] %v225
          %v227 = vld [vmem:[%s57 + $0x2a0] sm:$0xff]
          %228 = vst [vmem:[%s58 + $0x2a0] sm:$0xff] %v227
          %v229 = vld [vmem:[%s57 + $0x2a8] sm:$0xff]
          %230 = vst [vmem:[%s58 + $0x2a8] sm:$0xff] %v229
          %v231 = vld [vmem:[%s57 + $0x2b0] sm:$0xff]
          %232 = vst [vmem:[%s58 + $0x2b0] sm:$0xff] %v231
          %v233 = vld [vmem:[%s57 + $0x2b8] sm:$0xff]
          %234 = vst [vmem:[%s58 + $0x2b8] sm:$0xff] %v233
          %v235 = vld [vmem:[%s57 + $0x2c0] sm:$0xff]
          %236 = vst [vmem:[%s58 + $0x2c0] sm:$0xff] %v235
          %v237 = vld [vmem:[%s57 + $0x2c8] sm:$0xff]
          %238 = vst [vmem:[%s58 + $0x2c8] sm:$0xff] %v237
          %v239 = vld [vmem:[%s57 + $0x2d0] sm:$0xff]
          %240 = vst [vmem:[%s58 + $0x2d0] sm:$0xff] %v239
          %v241 = vld [vmem:[%s57 + $0x2d8] sm:$0xff]
          %242 = vst [vmem:[%s58 + $0x2d8] sm:$0xff] %v241
          %v243 = vld [vmem:[%s57 + $0x2e0] sm:$0xff]
          %244 = vst [vmem:[%s58 + $0x2e0] sm:$0xff] %v243
          %v245 = vld [vmem:[%s57 + $0x2e8] sm:$0xff]
          %246 = vst [vmem:[%s58 + $0x2e8] sm:$0xff] %v245
          %v247 = vld [vmem:[%s57 + $0x2f0] sm:$0xff]
          %248 = vst [vmem:[%s58 + $0x2f0] sm:$0xff] %v247
          %v249 = vld [vmem:[%s57 + $0x2f8] sm:$0xff]
          %250 = vst [vmem:[%s58 + $0x2f8] sm:$0xff] %v249
          %v251 = vld [vmem:[%s57 + $0x300] sm:$0xff]
          %252 = vst [vmem:[%s58 + $0x300] sm:$0xff] %v251
          %v253 = vld [vmem:[%s57 + $0x308] sm:$0xff]
          %254 = vst [vmem:[%s58 + $0x308] sm:$0xff] %v253
          %v255 = vld [vmem:[%s57 + $0x310] sm:$0xff]
          %256 = vst [vmem:[%s58 + $0x310] sm:$0xff] %v255
          %v257 = vld [vmem:[%s57 + $0x318] sm:$0xff]
          %258 = vst [vmem:[%s58 + $0x318] sm:$0xff] %v257
          %v259 = vld [vmem:[%s57 + $0x320] sm:$0xff]
          %260 = vst [vmem:[%s58 + $0x320] sm:$0xff] %v259
          %v261 = vld [vmem:[%s57 + $0x328] sm:$0xff]
          %262 = vst [vmem:[%s58 + $0x328] sm:$0xff] %v261
          %v263 = vld [vmem:[%s57 + $0x330] sm:$0xff]
          %264 = vst [vmem:[%s58 + $0x330] sm:$0xff] %v263
          %v265 = vld [vmem:[%s57 + $0x338] sm:$0xff]
          %266 = vst [vmem:[%s58 + $0x338] sm:$0xff] %v265
          %v267 = vld [vmem:[%s57 + $0x340] sm:$0xff]
          %268 = vst [vmem:[%s58 + $0x340] sm:$0xff] %v267
          %v269 = vld [vmem:[%s57 + $0x348] sm:$0xff]
          %270 = vst [vmem:[%s58 + $0x348] sm:$0xff] %v269
          %v271 = vld [vmem:[%s57 + $0x350] sm:$0xff]
          %272 = vst [vmem:[%s58 + $0x350] sm:$0xff] %v271
          %v273 = vld [vmem:[%s57 + $0x358] sm:$0xff]
          %274 = vst [vmem:[%s58 + $0x358] sm:$0xff] %v273
          %v275 = vld [vmem:[%s57 + $0x360] sm:$0xff]
          %276 = vst [vmem:[%s58 + $0x360] sm:$0xff] %v275
          %v277 = vld [vmem:[%s57 + $0x368] sm:$0xff]
          %278 = vst [vmem:[%s58 + $0x368] sm:$0xff] %v277
          %v279 = vld [vmem:[%s57 + $0x370] sm:$0xff]
          %280 = vst [vmem:[%s58 + $0x370] sm:$0xff] %v279
          %v281 = vld [vmem:[%s57 + $0x378] sm:$0xff]
          %282 = vst [vmem:[%s58 + $0x378] sm:$0xff] %v281
          %v283 = vld [vmem:[%s57 + $0x380] sm:$0xff]
          %284 = vst [vmem:[%s58 + $0x380] sm:$0xff] %v283
          %v285 = vld [vmem:[%s57 + $0x388] sm:$0xff]
          %286 = vst [vmem:[%s58 + $0x388] sm:$0xff] %v285
          %v287 = vld [vmem:[%s57 + $0x390] sm:$0xff]
          %288 = vst [vmem:[%s58 + $0x390] sm:$0xff] %v287
          %v289 = vld [vmem:[%s57 + $0x398] sm:$0xff]
          %290 = vst [vmem:[%s58 + $0x398] sm:$0xff] %v289
          %v291 = vld [vmem:[%s57 + $0x3a0] sm:$0xff]
          %292 = vst [vmem:[%s58 + $0x3a0] sm:$0xff] %v291
          %v293 = vld [vmem:[%s57 + $0x3a8] sm:$0xff]
          %294 = vst [vmem:[%s58 + $0x3a8] sm:$0xff] %v293
          %v295 = vld [vmem:[%s57 + $0x3b0] sm:$0xff]
          %296 = vst [vmem:[%s58 + $0x3b0] sm:$0xff] %v295
          %v297 = vld [vmem:[%s57 + $0x3b8] sm:$0xff]
          %298 = vst [vmem:[%s58 + $0x3b8] sm:$0xff] %v297
          %v299 = vld [vmem:[%s57 + $0x3c0] sm:$0xff]
          %300 = vst [vmem:[%s58 + $0x3c0] sm:$0xff] %v299
          %v301 = vld [vmem:[%s57 + $0x3c8] sm:$0xff]
          %302 = vst [vmem:[%s58 + $0x3c8] sm:$0xff] %v301
          %v303 = vld [vmem:[%s57 + $0x3d0] sm:$0xff]
          %304 = vst [vmem:[%s58 + $0x3d0] sm:$0xff] %v303
          %v305 = vld [vmem:[%s57 + $0x3d8] sm:$0xff]
          %306 = vst [vmem:[%s58 + $0x3d8] sm:$0xff] %v305
          %v307 = vld [vmem:[%s57 + $0x3e0] sm:$0xff]
          %308 = vst [vmem:[%s58 + $0x3e0] sm:$0xff] %v307
          %v309 = vld [vmem:[%s57 + $0x3e8] sm:$0xff]
          %310 = vst [vmem:[%s58 + $0x3e8] sm:$0xff] %v309
          %v311 = vld [vmem:[%s57 + $0x3f0] sm:$0xff]
          %312 = vst [vmem:[%s58 + $0x3f0] sm:$0xff] %v311
          %v313 = vld [vmem:[%s57 + $0x3f8] sm:$0xff]
          %314 = vst [vmem:[%s58 + $0x3f8] sm:$0xff] %v313
        $region49: #{policy_forward.1} parent=43 // loop_footer
          %s56 = sadd.s32 1, %s52
        $region50: #{policy_forward.1} parent=43 // loop_footer_branch
          %51 = sbr.rel target = $region46
        $region51: #{policy_forward.1} parent=43 // loop_exit
          _
      $region44: #{policy_forward.1} parent=28 // pred_fallthru
        _
      %p315 = pneg %p47
      // Predicated region
      $region52: #{policy_forward.1} parent=28 // pred_check
        _
      $region53: #{policy_forward.1} parent=28 // pred_check_branch
        %317 = sbr.rel (%p47) target = $region55
      $region54: #{policy_forward.1} parent=28 // pred_region
        %s318 = sand.u32 1024, 7
      $region55: #{policy_forward.1} parent=28 // pred_fallthru
        _
    $region29: #{policy_forward.1} parent=1 // pred_fallthru
      _
    // Predicated region
    $region30: #{policy_forward.1} parent=1 // pred_check
      %p31 = pneg %p27
    $region31: #{policy_forward.1} parent=1 // pred_check_branch
      %33 = sbr.rel (%p31) target = $region33
    $region32: #{policy_forward.1} parent=1 // pred_region
      %s34 = sshll.u32 1, 1024
      %s35 = ssub.s32 %s34, 1
      loop: start=0, step=1, limit=1
      $region34: #{policy_forward.1} parent=32 // loop_pre_header
        _
      $region35: #{policy_forward.1} parent=32 // loop_header
        %s37 = sphi 0, %s41
        %p38 = scmp.ge.s32.totalorder %s37, 1
        %s42 = sphi %s3, %s3
        %s43 = sphi [#allocation3], [#allocation3]
      $region36: #{policy_forward.1} parent=32 // loop_header_branch
        %40 = sbr.rel (%p38) target = $region40
      $region37: #{policy_forward.1} parent=32 // loop_body
        %v44 = vld [vmem:[%s42] sm:%s35]
        %45 = vst [vmem:[%s43] sm:%s35] %v44
      $region38: #{policy_forward.1} parent=32 // loop_footer
        %s41 = sadd.s32 1, %s37
      $region39: #{policy_forward.1} parent=32 // loop_footer_branch
        %36 = sbr.rel target = $region35
      $region40: #{policy_forward.1} parent=32 // loop_exit
        _
    $region33: #{policy_forward.1} parent=1 // pred_fallthru
      _
    // Predicated region
    $region56: #{policy_forward.1} parent=1 // pred_check
      _
    $region57: #{policy_forward.1} parent=1 // pred_check_branch
      %321 = sbr.rel (0) target = $region59
    $region58: #{policy_forward.1} parent=1 // pred_region
      %322 = vsyncadd [#allocation4], 16384
    $region59: #{policy_forward.1} parent=1 // pred_fallthru
      _
    %v323 = vld [vmem:[%s1] sm:$0xff]
    %v324 = vld [vmem:[%s1 + $0x8] sm:$0xff]
    %v325 = vld [vmem:[%s0] sm:$0xff]
    %v326 = vld [vmem:[%s0 + $0x8] sm:$0xff]
    %v327 = vld [vmem:[%s0 + $0x10] sm:$0xff]
    %v328 = vld [vmem:[%s0 + $0x18] sm:$0xff]
    %v329 = vld [vmem:[%s0 + $0x20] sm:$0x1]
    %v330 = vld [vmem:[%s0 + $0x28] sm:$0x1]
    %v331 = vld [vmem:[%s0 + $0x30] sm:$0x1]
    %v332 = vld [vmem:[%s0 + $0x38] sm:$0x1]
    %v333 = vld [vmem:[%s2] sm:$0xff]
    %v334 = vld [vmem:[%s2 + $0x8] sm:$0xff]
    %336 = vset.pattern.permute.xlu0 0
    %337 = vperm.xlu0 %336, %v333
    %v338 = vpop.permute.xlu0 %337
    %341 = vset.pattern.permute.xlu0 0
    %342 = vperm.xlu0 %341, %v334
    %v343 = vpop.permute.xlu0 %342
    %vm345 = vcmask 72704
    %v347 = vsel %vm345, %v323, 0
    %v350 = vsel %vm345, %v324, 0
    %vm352 = vcmask 1040384
    %v354 = vsel %vm352, %v329, 0
    %v357 = vsel %vm352, %v330, 0
    %v360 = vsel %vm352, %v331, 0
    %v363 = vsel %vm352, %v332, 0
    %365 = vmatprep.subr.mxu0 0.0
    %366 = vmatpush1.msra.mxu0 0.0
    %367 = vmatprep.subr.mxu0 0.0
    %368 = vmatpush1.msra.mxu0 0.0
    %369 = vmatprep.subr.mxu0 0.0
    %370 = vmatpush1.msra.mxu0 0.0
    %371 = vmatprep.subr.mxu0 0.0
    %372 = vmatpush1.msra.mxu0 0.0
    %373 = vmatprep.subr.mxu0 0.0
    %374 = vmatpush1.msra.mxu0 0.0
    %375 = vmatprep.subr.mxu0 0.0
    %376 = vmatpush1.msra.mxu0 0.0
    %377 = vmatprep.subr.mxu0 0.0
    %378 = vmatpush1.msra.mxu0 0.0
    %379 = vmatprep.subr.mxu0 0.0
    %380 = vmatpush1.msra.mxu0 0.0
    %381 = vmatprep.subr.mxu0 0.0
    %382 = vmatpush1.msra.mxu0 0.0
    %383 = vmatprep.subr.mxu0 0.0
    %384 = vmatpush1.msra.mxu0 0.0
    %385 = vmatprep.subr.mxu0 0.0
    %386 = vmatpush1.msra.mxu0 0.0
    %387 = vmatprep.subr.mxu0 0.0
    %388 = vmatpush1.msra.mxu0 0.0
    %389 = vmatprep.subr.mxu0 0.0
    %390 = vmatpush1.msra.mxu0 0.0
    %391 = vmatprep.subr.mxu0 0.0
    %392 = vmatpush1.msra.mxu0 0.0
    %393 = vmatprep.subr.mxu0 %v357
    %394 = vmatpush1.msra.mxu0 %v354
    %395 = vmatprep.subr.mxu0 %v326
    %396 = vmatpush1.msra.mxu0 %v325
    %397 = vmatprep.subr.mxu0 0.0
    %398 = vmatpush2.msra.mxu0 0.0
    %399 = vmatprep.subr.mxu0 0.0
    %400 = vmatpush2.msra.mxu0 0.0
    %401 = vmatprep.subr.mxu0 0.0
    %402 = vmatpush2.msra.mxu0 0.0
    %403 = vmatprep.subr.mxu0 0.0
    %404 = vmatpush2.msra.mxu0 0.0
    %405 = vmatprep.subr.mxu0 0.0
    %406 = vmatpush2.msra.mxu0 0.0
    %407 = vmatprep.subr.mxu0 0.0
    %408 = vmatpush2.msra.mxu0 0.0
    %409 = vmatprep.subr.mxu0 0.0
    %410 = vmatpush2.msra.mxu0 0.0
    %411 = vmatprep.subr.mxu0 0.0
    %412 = vmatpush2.msra.mxu0 0.0
    %413 = vmatprep.subr.mxu0 0.0
    %414 = vmatpush2.msra.mxu0 0.0
    %415 = vmatprep.subr.mxu0 0.0
    %416 = vmatpush2.msra.mxu0 0.0
    %417 = vmatprep.subr.mxu0 0.0
    %418 = vmatpush2.msra.mxu0 0.0
    %419 = vmatprep.subr.mxu0 0.0
    %420 = vmatpush2.msra.mxu0 0.0
    %421 = vmatprep.subr.mxu0 0.0
    %422 = vmatpush2.msra.mxu0 0.0
    %423 = vmatprep.subr.mxu0 0.0
    %424 = vmatpush2.msra.mxu0 0.0
    %425 = vmatprep.subr.mxu0 0.0
    %426 = vmatpush2.msra.mxu0 0.0
    %427 = vmatprep.subr.mxu0 0.0
    %428 = vmatpush2.msra.mxu0 0.0
    %429 = vmatprep.mubr.f32.mxu0 0.0
    %430 = vmatmul.mubr.f32.gmra.mxu0 %v347
    %v431 = vpop.f32.mrf.mxu0
    %v432 = vadd.f32 %v338, %v431
    %v433 = vpop.f32.mrf.mxu0
    %v434 = vadd.f32 %v338, %v433
    %435 = vmatprep.mubr.f32.mxu0 0.0
    %436 = vmatmul.mubr.f32.gmra.mxu0 %v350
    %v437 = vpop.f32.mrf.mxu0
    %v438 = vadd.f32 %v343, %v437
    %v439 = vpop.f32.mrf.mxu0
    %v440 = vadd.f32 %v343, %v439
    %441 = vdwg.mxu0
    %442 = vmatprep.subr.mxu0 0.0
    %443 = vmatpush1.msra.mxu0 0.0
    %444 = vmatprep.subr.mxu0 0.0
    %445 = vmatpush1.msra.mxu0 0.0
    %446 = vmatprep.subr.mxu0 0.0
    %447 = vmatpush1.msra.mxu0 0.0
    %448 = vmatprep.subr.mxu0 0.0
    %449 = vmatpush1.msra.mxu0 0.0
    %450 = vmatprep.subr.mxu0 0.0
    %451 = vmatpush1.msra.mxu0 0.0
    %452 = vmatprep.subr.mxu0 0.0
    %453 = vmatpush1.msra.mxu0 0.0
    %454 = vmatprep.subr.mxu0 0.0
    %455 = vmatpush1.msra.mxu0 0.0
    %456 = vmatprep.subr.mxu0 0.0
    %457 = vmatpush1.msra.mxu0 0.0
    %458 = vmatprep.subr.mxu0 0.0
    %459 = vmatpush1.msra.mxu0 0.0
    %460 = vmatprep.subr.mxu0 0.0
    %461 = vmatpush1.msra.mxu0 0.0
    %462 = vmatprep.subr.mxu0 0.0
    %463 = vmatpush1.msra.mxu0 0.0
    %464 = vmatprep.subr.mxu0 0.0
    %465 = vmatpush1.msra.mxu0 0.0
    %466 = vmatprep.subr.mxu0 0.0
    %467 = vmatpush1.msra.mxu0 0.0
    %468 = vmatprep.subr.mxu0 0.0
    %469 = vmatpush1.msra.mxu0 0.0
    %470 = vmatprep.subr.mxu0 %v363
    %471 = vmatpush1.msra.mxu0 %v360
    %472 = vmatprep.subr.mxu0 %v328
    %473 = vmatpush1.msra.mxu0 %v327
    %474 = vmatprep.subr.mxu0 0.0
    %475 = vmatpush2.msra.mxu0 0.0
    %476 = vmatprep.subr.mxu0 0.0
    %477 = vmatpush2.msra.mxu0 0.0
    %478 = vmatprep.subr.mxu0 0.0
    %479 = vmatpush2.msra.mxu0 0.0
    %480 = vmatprep.subr.mxu0 0.0
    %481 = vmatpush2.msra.mxu0 0.0
    %482 = vmatprep.subr.mxu0 0.0
    %483 = vmatpush2.msra.mxu0 0.0
    %484 = vmatprep.subr.mxu0 0.0
    %485 = vmatpush2.msra.mxu0 0.0
    %486 = vmatprep.subr.mxu0 0.0
    %487 = vmatpush2.msra.mxu0 0.0
    %488 = vmatprep.subr.mxu0 0.0
    %489 = vmatpush2.msra.mxu0 0.0
    %490 = vmatprep.subr.mxu0 0.0
    %491 = vmatpush2.msra.mxu0 0.0
    %492 = vmatprep.subr.mxu0 0.0
    %493 = vmatpush2.msra.mxu0 0.0
    %494 = vmatprep.subr.mxu0 0.0
    %495 = vmatpush2.msra.mxu0 0.0
    %496 = vmatprep.subr.mxu0 0.0
    %497 = vmatpush2.msra.mxu0 0.0
    %498 = vmatprep.subr.mxu0 0.0
    %499 = vmatpush2.msra.mxu0 0.0
    %500 = vmatprep.subr.mxu0 0.0
    %501 = vmatpush2.msra.mxu0 0.0
    %502 = vmatprep.subr.mxu0 0.0
    %503 = vmatpush2.msra.mxu0 0.0
    %504 = vmatprep.subr.mxu0 0.0
    %505 = vmatpush2.msra.mxu0 0.0
    %506 = vmatprep.mubr.f32.mxu0 0.0
    %507 = vmatmul.mubr.f32.gmra.mxu0 %v347
    %v508 = vpop.f32.mrf.mxu0
    %v509 = vadd.f32 %v338, %v508
    %v510 = vpop.f32.mrf.mxu0
    %v511 = vadd.f32 %v338, %v510
    %512 = vmatprep.mubr.f32.mxu0 0.0
    %513 = vmatmul.mubr.f32.gmra.mxu0 %v350
    %v514 = vpop.f32.mrf.mxu0
    %v515 = vadd.f32 %v343, %v514
    %v516 = vpop.f32.mrf.mxu0
    %v517 = vadd.f32 %v343, %v516
    %518 = vdwg.mxu0
    %v519 = vmax.f32 %v432, 0.0
    %v520 = vmax.f32 %v434, 0.0
    %v521 = vmax.f32 %v509, 0.0
    %v522 = vmax.f32 %v511, 0.0
    %v523 = vmax.f32 %v438, 0.0
    %v524 = vmax.f32 %v440, 0.0
    %v525 = vmax.f32 %v515, 0.0
    %v526 = vmax.f32 %v517, 0.0
    %v527 = vmax.f32 %v519, %v520
    %v528 = vmax.f32 %v523, %v524
    %v529 = vmax.f32 %v521, %v522
    %v530 = vmax.f32 %v525, %v526
    %v531 = vmax.f32 %v527, %v529
    %v532 = vmax.f32 %v528, %v530
    %533 = vrot.lane.b32.xlu0 %v531, 64
    %v534 = vpop.permute.xlu0 %533
    %535 = vrot.lane.b32.xlu0 %v532, 64
    %v536 = vpop.permute.xlu0 %535
    %v537 = vlaneseq
    %v538 = vand.u32 %v537, 127
    %vm539 = vcmp.lt.s32.totalorder %v538, 64
    %v541 = vrot.slane %v534, 1
    %v543 = vsel %vm539, %v531, %v541
    %544 = vst [vmem:[#allocation2] sm:$0x1] %v543
    %v546 = vrot.slane %v531, 1
    %v548 = vsel %vm539, %v534, %v546
    %549 = vst [vmem:[#allocation2 + $0x1] sm:$0x1] %v548
    %v552 = vunpack.c.l.s4 1983009808
    %v553 = vunpack.c.0.s8 %v552
    %v554 = vlaneseq
    %v555 = vshrl.u32 %v554, 7
    %v556 = vsub.s32 %v553, %v555
    %v557 = vrot.slane %v543, %v556
    %v558 = vcombine.high %v557, %v557
    %560 = vst [vmem:[#allocation2 + $0x2] sm:$0x1] %v558
    %v563 = vunpack.c.l.s4 1983009808
    %v564 = vunpack.c.0.s8 %v563
    %v565 = vlaneseq
    %v566 = vshrl.u32 %v565, 7
    %v567 = vsub.s32 %v564, %v566
    %v568 = vrot.slane %v548, %v567
    %v569 = vcombine.high %v568, %v568
    %571 = vst [vmem:[#allocation2 + $0x3] sm:$0x1] %v569
    %v572 = vcombine.high %v543, %v543
    %v574 = vunpack.c.l.s4 1983009808
    %v575 = vunpack.c.0.s8 %v574
    %v576 = vlaneseq
    %v577 = vshrl.u32 %v576, 7
    %v578 = vsub.s32 %v575, %v577
    %v579 = vrot.slane %v572, %v578
    %581 = vst [vmem:[#allocation2 + $0x4] sm:$0x1] %v579
    %v582 = vcombine.high %v548, %v548
    %v584 = vunpack.c.l.s4 1983009808
    %v585 = vunpack.c.0.s8 %v584
    %v586 = vlaneseq
    %v587 = vshrl.u32 %v586, 7
    %v588 = vsub.s32 %v585, %v587
    %v589 = vrot.slane %v582, %v588
    %591 = vst [vmem:[#allocation2 + $0x5] sm:$0x1] %v589
    %v592 = vcombine.high %v579, %v579
    %594 = vst [vmem:[#allocation2 + $0x6] sm:$0x1] %v592
    %v595 = vcombine.high %v589, %v589
    %597 = vst [vmem:[#allocation2 + $0x7] sm:$0x1] %v595
    %v599 = vrot.slane %v536, 1
    %v601 = vsel %vm539, %v532, %v599
    %602 = vst [vmem:[#allocation2 + $0x8] sm:$0x1] %v601
    %v604 = vrot.slane %v532, 1
    %v606 = vsel %vm539, %v536, %v604
    %607 = vst [vmem:[#allocation2 + $0x9] sm:$0x1] %v606
    %v610 = vunpack.c.l.s4 1983009808
    %v611 = vunpack.c.0.s8 %v610
    %v612 = vlaneseq
    %v613 = vshrl.u32 %v612, 7
    %v614 = vsub.s32 %v611, %v613
    %v615 = vrot.slane %v601, %v614
    %v616 = vcombine.high %v615, %v615
    %618 = vst [vmem:[#allocation2 + $0xa] sm:$0x1] %v616
    %v621 = vunpack.c.l.s4 1983009808
    %v622 = vunpack.c.0.s8 %v621
    %v623 = vlaneseq
    %v624 = vshrl.u32 %v623, 7
    %v625 = vsub.s32 %v622, %v624
    %v626 = vrot.slane %v606, %v625
    %v627 = vcombine.high %v626, %v626
    %629 = vst [vmem:[#allocation2 + $0xb] sm:$0x1] %v627
    %v630 = vcombine.high %v601, %v601
    %v632 = vunpack.c.l.s4 1983009808
    %v633 = vunpack.c.0.s8 %v632
    %v634 = vlaneseq
    %v635 = vshrl.u32 %v634, 7
    %v636 = vsub.s32 %v633, %v635
    %v637 = vrot.slane %v630, %v636
    %639 = vst [vmem:[#allocation2 + $0xc] sm:$0x1] %v637
    %v640 = vcombine.high %v606, %v606
    %v642 = vunpack.c.l.s4 1983009808
    %v643 = vunpack.c.0.s8 %v642
    %v644 = vlaneseq
    %v645 = vshrl.u32 %v644, 7
    %v646 = vsub.s32 %v643, %v645
    %v647 = vrot.slane %v640, %v646
    %649 = vst [vmem:[#allocation2 + $0xd] sm:$0x1] %v647
    %v650 = vcombine.high %v637, %v637
    %652 = vst [vmem:[#allocation2 + $0xe] sm:$0x1] %v650
    %v653 = vcombine.high %v647, %v647
    %655 = vst [vmem:[#allocation2 + $0xf] sm:$0x1] %v653
    %v656 = vld [vmem:[#allocation2] sm:$0xff]
    %v657 = vld [vmem:[#allocation2 + $0x8] sm:$0xff]
    %s658 = smul.u32 4, 128
    %s659 = smul.u32 %s658, 2
    %s660 = sshll.u32 %s659, 4
    %661 = dma.done [#allocation4], %s660
    %v664 = vcombine.high %v656, %v656
    %v666 = vunpack.c.l.s4 1983009808
    %v667 = vunpack.c.0.s8 %v666
    %v668 = vlaneseq
    %v669 = vshrl.u32 %v668, 7
    %v670 = vsub.s32 %v667, %v669
    %v671 = vrot.slane %v656, %v670
    %v673 = vunpack.c.l.s4 1983009808
    %v674 = vunpack.c.0.s8 %v673
    %v675 = vlaneseq
    %v676 = vshrl.u32 %v675, 7
    %v677 = vsub.s32 %v674, %v676
    %v678 = vrot.slane %v664, %v677
    %v679 = vcombine.high %v671, %v671
    %v680 = vcombine.high %v678, %v678
    %v681 = vcombine.high %v657, %v657
    %v683 = vunpack.c.l.s4 1983009808
    %v684 = vunpack.c.0.s8 %v683
    %v685 = vlaneseq
    %v686 = vshrl.u32 %v685, 7
    %v687 = vsub.s32 %v684, %v686
    %v688 = vrot.slane %v657, %v687
    %v690 = vunpack.c.l.s4 1983009808
    %v691 = vunpack.c.0.s8 %v690
    %v692 = vlaneseq
    %v693 = vshrl.u32 %v692, 7
    %v694 = vsub.s32 %v691, %v693
    %v695 = vrot.slane %v681, %v694
    %v696 = vcombine.high %v688, %v688
    %v697 = vcombine.high %v695, %v695
    %v706 = vpack.c.bf16 %v671, %v671
    %v707 = vpack.c.bf16 %v679, %v679
    %v708 = vpack.c.bf16 %v678, %v678
    %v709 = vpack.c.bf16 %v680, %v680
    %v710 = vpack.c.bf16 %v688, %v688
    %v711 = vpack.c.bf16 %v696, %v696
    %v712 = vpack.c.bf16 %v695, %v695
    %v713 = vpack.c.bf16 %v697, %v697
    %v714 = vld [vmem:[#allocation3] sm:$0xff]
    %v715 = vld [vmem:[#allocation3 + $0x8] sm:$0xff]
    %v716 = vld [vmem:[#allocation3 + $0x10] sm:$0xff]
    %v717 = vld [vmem:[#allocation3 + $0x18] sm:$0xff]
    %v718 = vld [vmem:[#allocation3 + $0x20] sm:$0xff]
    %v719 = vld [vmem:[#allocation3 + $0x28] sm:$0xff]
    %v720 = vld [vmem:[#allocation3 + $0x30] sm:$0xff]
    %v721 = vld [vmem:[#allocation3 + $0x38] sm:$0xff]
    %v722 = vld [vmem:[#allocation3 + $0x40] sm:$0xff]
    %v723 = vld [vmem:[#allocation3 + $0x48] sm:$0xff]
    %v724 = vld [vmem:[#allocation3 + $0x50] sm:$0xff]
    %v725 = vld [vmem:[#allocation3 + $0x58] sm:$0xff]
    %v726 = vld [vmem:[#allocation3 + $0x60] sm:$0xff]
    %v727 = vld [vmem:[#allocation3 + $0x68] sm:$0xff]
    %v728 = vld [vmem:[#allocation3 + $0x70] sm:$0xff]
    %v729 = vld [vmem:[#allocation3 + $0x78] sm:$0xff]
    %v730 = vld [vmem:[#allocation3 + $0x80] sm:$0xff]
    %v731 = vld [vmem:[#allocation3 + $0x88] sm:$0xff]
    %v732 = vld [vmem:[#allocation3 + $0x90] sm:$0xff]
    %v733 = vld [vmem:[#allocation3 + $0x98] sm:$0xff]
    %v734 = vld [vmem:[#allocation3 + $0xa0] sm:$0xff]
    %v735 = vld [vmem:[#allocation3 + $0xa8] sm:$0xff]
    %v736 = vld [vmem:[#allocation3 + $0xb0] sm:$0xff]
    %v737 = vld [vmem:[#allocation3 + $0xb8] sm:$0xff]
    %v738 = vld [vmem:[#allocation3 + $0xc0] sm:$0xff]
    %v739 = vld [vmem:[#allocation3 + $0xc8] sm:$0xff]
    %v740 = vld [vmem:[#allocation3 + $0xd0] sm:$0xff]
    %v741 = vld [vmem:[#allocation3 + $0xd8] sm:$0xff]
    %v742 = vld [vmem:[#allocation3 + $0xe0] sm:$0xff]
    %v743 = vld [vmem:[#allocation3 + $0xe8] sm:$0xff]
    %v744 = vld [vmem:[#allocation3 + $0xf0] sm:$0xff]
    %v745 = vld [vmem:[#allocation3 + $0xf8] sm:$0xff]
    %v746 = vld [vmem:[#allocation3 + $0x100] sm:$0xff]
    %v747 = vld [vmem:[#allocation3 + $0x108] sm:$0xff]
    %v748 = vld [vmem:[#allocation3 + $0x110] sm:$0xff]
    %v749 = vld [vmem:[#allocation3 + $0x118] sm:$0xff]
    %v750 = vld [vmem:[#allocation3 + $0x120] sm:$0xff]
    %v751 = vld [vmem:[#allocation3 + $0x128] sm:$0xff]
    %v752 = vld [vmem:[#allocation3 + $0x130] sm:$0xff]
    %v753 = vld [vmem:[#allocation3 + $0x138] sm:$0xff]
    %v754 = vld [vmem:[#allocation3 + $0x140] sm:$0xff]
    %v755 = vld [vmem:[#allocation3 + $0x148] sm:$0xff]
    %v756 = vld [vmem:[#allocation3 + $0x150] sm:$0xff]
    %v757 = vld [vmem:[#allocation3 + $0x158] sm:$0xff]
    %v758 = vld [vmem:[#allocation3 + $0x160] sm:$0xff]
    %v759 = vld [vmem:[#allocation3 + $0x168] sm:$0xff]
    %v760 = vld [vmem:[#allocation3 + $0x170] sm:$0xff]
    %v761 = vld [vmem:[#allocation3 + $0x178] sm:$0xff]
    %v762 = vld [vmem:[#allocation3 + $0x180] sm:$0xff]
    %v763 = vld [vmem:[#allocation3 + $0x188] sm:$0xff]
    %v764 = vld [vmem:[#allocation3 + $0x190] sm:$0xff]
    %v765 = vld [vmem:[#allocation3 + $0x198] sm:$0xff]
    %v766 = vld [vmem:[#allocation3 + $0x1a0] sm:$0xff]
    %v767 = vld [vmem:[#allocation3 + $0x1a8] sm:$0xff]
    %v768 = vld [vmem:[#allocation3 + $0x1b0] sm:$0xff]
    %v769 = vld [vmem:[#allocation3 + $0x1b8] sm:$0xff]
    %v770 = vld [vmem:[#allocation3 + $0x1c0] sm:$0xff]
    %v771 = vld [vmem:[#allocation3 + $0x1c8] sm:$0xff]
    %v772 = vld [vmem:[#allocation3 + $0x1d0] sm:$0xff]
    %v773 = vld [vmem:[#allocation3 + $0x1d8] sm:$0xff]
    %v774 = vld [vmem:[#allocation3 + $0x1e0] sm:$0xff]
    %v775 = vld [vmem:[#allocation3 + $0x1e8] sm:$0xff]
    %v776 = vld [vmem:[#allocation3 + $0x1f0] sm:$0xff]
    %v777 = vld [vmem:[#allocation3 + $0x1f8] sm:$0xff]
    %v778 = vld [vmem:[#allocation3 + $0x200] sm:$0xff]
    %v779 = vld [vmem:[#allocation3 + $0x208] sm:$0xff]
    %v780 = vld [vmem:[#allocation3 + $0x210] sm:$0xff]
    %v781 = vld [vmem:[#allocation3 + $0x218] sm:$0xff]
    %v782 = vld [vmem:[#allocation3 + $0x220] sm:$0xff]
    %v783 = vld [vmem:[#allocation3 + $0x228] sm:$0xff]
    %v784 = vld [vmem:[#allocation3 + $0x230] sm:$0xff]
    %v785 = vld [vmem:[#allocation3 + $0x238] sm:$0xff]
    %v786 = vld [vmem:[#allocation3 + $0x240] sm:$0xff]
    %v787 = vld [vmem:[#allocation3 + $0x248] sm:$0xff]
    %v788 = vld [vmem:[#allocation3 + $0x250] sm:$0xff]
    %v789 = vld [vmem:[#allocation3 + $0x258] sm:$0xff]
    %v790 = vld [vmem:[#allocation3 + $0x260] sm:$0xff]
    %v791 = vld [vmem:[#allocation3 + $0x268] sm:$0xff]
    %v792 = vld [vmem:[#allocation3 + $0x270] sm:$0xff]
    %v793 = vld [vmem:[#allocation3 + $0x278] sm:$0xff]
    %v794 = vld [vmem:[#allocation3 + $0x280] sm:$0xff]
    %v795 = vld [vmem:[#allocation3 + $0x288] sm:$0xff]
    %v796 = vld [vmem:[#allocation3 + $0x290] sm:$0xff]
    %v797 = vld [vmem:[#allocation3 + $0x298] sm:$0xff]
    %v798 = vld [vmem:[#allocation3 + $0x2a0] sm:$0xff]
    %v799 = vld [vmem:[#allocation3 + $0x2a8] sm:$0xff]
    %v800 = vld [vmem:[#allocation3 + $0x2b0] sm:$0xff]
    %v801 = vld [vmem:[#allocation3 + $0x2b8] sm:$0xff]
    %v802 = vld [vmem:[#allocation3 + $0x2c0] sm:$0xff]
    %v803 = vld [vmem:[#allocation3 + $0x2c8] sm:$0xff]
    %v804 = vld [vmem:[#allocation3 + $0x2d0] sm:$0xff]
    %v805 = vld [vmem:[#allocation3 + $0x2d8] sm:$0xff]
    %v806 = vld [vmem:[#allocation3 + $0x2e0] sm:$0xff]
    %v807 = vld [vmem:[#allocation3 + $0x2e8] sm:$0xff]
    %v808 = vld [vmem:[#allocation3 + $0x2f0] sm:$0xff]
    %v809 = vld [vmem:[#allocation3 + $0x2f8] sm:$0xff]
    %v810 = vld [vmem:[#allocation3 + $0x300] sm:$0xff]
    %v811 = vld [vmem:[#allocation3 + $0x308] sm:$0xff]
    %v812 = vld [vmem:[#allocation3 + $0x310] sm:$0xff]
    %v813 = vld [vmem:[#allocation3 + $0x318] sm:$0xff]
    %v814 = vld [vmem:[#allocation3 + $0x320] sm:$0xff]
    %v815 = vld [vmem:[#allocation3 + $0x328] sm:$0xff]
    %v816 = vld [vmem:[#allocation3 + $0x330] sm:$0xff]
    %v817 = vld [vmem:[#allocation3 + $0x338] sm:$0xff]
    %v818 = vld [vmem:[#allocation3 + $0x340] sm:$0xff]
    %v819 = vld [vmem:[#allocation3 + $0x348] sm:$0xff]
    %v820 = vld [vmem:[#allocation3 + $0x350] sm:$0xff]
    %v821 = vld [vmem:[#allocation3 + $0x358] sm:$0xff]
    %v822 = vld [vmem:[#allocation3 + $0x360] sm:$0xff]
    %v823 = vld [vmem:[#allocation3 + $0x368] sm:$0xff]
    %v824 = vld [vmem:[#allocation3 + $0x370] sm:$0xff]
    %v825 = vld [vmem:[#allocation3 + $0x378] sm:$0xff]
    %v826 = vld [vmem:[#allocation3 + $0x380] sm:$0xff]
    %v827 = vld [vmem:[#allocation3 + $0x388] sm:$0xff]
    %v828 = vld [vmem:[#allocation3 + $0x390] sm:$0xff]
    %v829 = vld [vmem:[#allocation3 + $0x398] sm:$0xff]
    %v830 = vld [vmem:[#allocation3 + $0x3a0] sm:$0xff]
    %v831 = vld [vmem:[#allocation3 + $0x3a8] sm:$0xff]
    %v832 = vld [vmem:[#allocation3 + $0x3b0] sm:$0xff]
    %v833 = vld [vmem:[#allocation3 + $0x3b8] sm:$0xff]
    %v834 = vld [vmem:[#allocation3 + $0x3c0] sm:$0xff]
    %v835 = vld [vmem:[#allocation3 + $0x3c8] sm:$0xff]
    %v836 = vld [vmem:[#allocation3 + $0x3d0] sm:$0xff]
    %v837 = vld [vmem:[#allocation3 + $0x3d8] sm:$0xff]
    %v838 = vld [vmem:[#allocation3 + $0x3e0] sm:$0xff]
    %v839 = vld [vmem:[#allocation3 + $0x3e8] sm:$0xff]
    %v840 = vld [vmem:[#allocation3 + $0x3f0] sm:$0xff]
    %v841 = vld [vmem:[#allocation3 + $0x3f8] sm:$0xff]
    %v842 = vld [vmem:[%s4] sm:$0x3]
    %v844 = vlaneseq
    %v845 = vshrl.u32 %v844, 7
    %v846 = vsub.s32 0, %v845
    %v847 = vrot.slane %v842, %v846
    %v848 = vlaneseq
    %v849 = vshrl.u32 %v848, 7
    %v850 = vsub.s32 1, %v849
    %v851 = vrot.slane %v842, %v850
    %v982 = vunpack.c.l.b16 %v714
    %v983 = vunpack.c.h.b16 %v714
    %v984 = vunpack.c.l.b16 %v715
    %v985 = vunpack.c.h.b16 %v715
    %v986 = vunpack.c.l.b16 %v716
    %v987 = vunpack.c.h.b16 %v716
    %v988 = vunpack.c.l.b16 %v717
    %v989 = vunpack.c.h.b16 %v717
    %v990 = vunpack.c.l.b16 %v718
    %v991 = vunpack.c.h.b16 %v718
    %v992 = vunpack.c.l.b16 %v719
    %v993 = vunpack.c.h.b16 %v719
    %v994 = vunpack.c.l.b16 %v720
    %v995 = vunpack.c.h.b16 %v720
    %v996 = vunpack.c.l.b16 %v721
    %v997 = vunpack.c.h.b16 %v721
    %v998 = vunpack.c.l.b16 %v722
    %v999 = vunpack.c.h.b16 %v722
    %v1000 = vunpack.c.l.b16 %v723
    %v1001 = vunpack.c.h.b16 %v723
    %v1002 = vunpack.c.l.b16 %v724
    %v1003 = vunpack.c.h.b16 %v724
    %v1004 = vunpack.c.l.b16 %v725
    %v1005 = vunpack.c.h.b16 %v725
    %v1006 = vunpack.c.l.b16 %v726
    %v1007 = vunpack.c.h.b16 %v726
    %v1008 = vunpack.c.l.b16 %v727
    %v1009 = vunpack.c.h.b16 %v727
    %v1010 = vunpack.c.l.b16 %v728
    %v1011 = vunpack.c.h.b16 %v728
    %v1012 = vunpack.c.l.b16 %v729
    %v1013 = vunpack.c.h.b16 %v729
    %v1014 = vunpack.c.l.b16 %v730
    %v1015 = vunpack.c.h.b16 %v730
    %v1016 = vunpack.c.l.b16 %v731
    %v1017 = vunpack.c.h.b16 %v731
    %v1018 = vunpack.c.l.b16 %v732
    %v1019 = vunpack.c.h.b16 %v732
    %v1020 = vunpack.c.l.b16 %v733
    %v1021 = vunpack.c.h.b16 %v733
    %v1022 = vunpack.c.l.b16 %v734
    %v1023 = vunpack.c.h.b16 %v734
    %v1024 = vunpack.c.l.b16 %v735
    %v1025 = vunpack.c.h.b16 %v735
    %v1026 = vunpack.c.l.b16 %v736
    %v1027 = vunpack.c.h.b16 %v736
    %v1028 = vunpack.c.l.b16 %v737
    %v1029 = vunpack.c.h.b16 %v737
    %v1030 = vunpack.c.l.b16 %v738
    %v1031 = vunpack.c.h.b16 %v738
    %v1032 = vunpack.c.l.b16 %v739
    %v1033 = vunpack.c.h.b16 %v739
    %v1034 = vunpack.c.l.b16 %v740
    %v1035 = vunpack.c.h.b16 %v740
    %v1036 = vunpack.c.l.b16 %v741
    %v1037 = vunpack.c.h.b16 %v741
    %v1038 = vunpack.c.l.b16 %v742
    %v1039 = vunpack.c.h.b16 %v742
    %v1040 = vunpack.c.l.b16 %v743
    %v1041 = vunpack.c.h.b16 %v743
    %v1042 = vunpack.c.l.b16 %v744
    %v1043 = vunpack.c.h.b16 %v744
    %v1044 = vunpack.c.l.b16 %v745
    %v1045 = vunpack.c.h.b16 %v745
    %v1046 = vunpack.c.l.b16 %v746
    %v1047 = vunpack.c.h.b16 %v746
    %v1048 = vunpack.c.l.b16 %v747
    %v1049 = vunpack.c.h.b16 %v747
    %v1050 = vunpack.c.l.b16 %v748
    %v1051 = vunpack.c.h.b16 %v748
    %v1052 = vunpack.c.l.b16 %v749
    %v1053 = vunpack.c.h.b16 %v749
    %v1054 = vunpack.c.l.b16 %v750
    %v1055 = vunpack.c.h.b16 %v750
    %v1056 = vunpack.c.l.b16 %v751
    %v1057 = vunpack.c.h.b16 %v751
    %v1058 = vunpack.c.l.b16 %v752
    %v1059 = vunpack.c.h.b16 %v752
    %v1060 = vunpack.c.l.b16 %v753
    %v1061 = vunpack.c.h.b16 %v753
    %v1062 = vunpack.c.l.b16 %v754
    %v1063 = vunpack.c.h.b16 %v754
    %v1064 = vunpack.c.l.b16 %v755
    %v1065 = vunpack.c.h.b16 %v755
    %v1066 = vunpack.c.l.b16 %v756
    %v1067 = vunpack.c.h.b16 %v756
    %v1068 = vunpack.c.l.b16 %v757
    %v1069 = vunpack.c.h.b16 %v757
    %v1070 = vunpack.c.l.b16 %v758
    %v1071 = vunpack.c.h.b16 %v758
    %v1072 = vunpack.c.l.b16 %v759
    %v1073 = vunpack.c.h.b16 %v759
    %v1074 = vunpack.c.l.b16 %v760
    %v1075 = vunpack.c.h.b16 %v760
    %v1076 = vunpack.c.l.b16 %v761
    %v1077 = vunpack.c.h.b16 %v761
    %v1078 = vunpack.c.l.b16 %v762
    %v1079 = vunpack.c.h.b16 %v762
    %v1080 = vunpack.c.l.b16 %v763
    %v1081 = vunpack.c.h.b16 %v763
    %v1082 = vunpack.c.l.b16 %v764
    %v1083 = vunpack.c.h.b16 %v764
    %v1084 = vunpack.c.l.b16 %v765
    %v1085 = vunpack.c.h.b16 %v765
    %v1086 = vunpack.c.l.b16 %v766
    %v1087 = vunpack.c.h.b16 %v766
    %v1088 = vunpack.c.l.b16 %v767
    %v1089 = vunpack.c.h.b16 %v767
    %v1090 = vunpack.c.l.b16 %v768
    %v1091 = vunpack.c.h.b16 %v768
    %v1092 = vunpack.c.l.b16 %v769
    %v1093 = vunpack.c.h.b16 %v769
    %v1094 = vunpack.c.l.b16 %v770
    %v1095 = vunpack.c.h.b16 %v770
    %v1096 = vunpack.c.l.b16 %v771
    %v1097 = vunpack.c.h.b16 %v771
    %v1098 = vunpack.c.l.b16 %v772
    %v1099 = vunpack.c.h.b16 %v772
    %v1100 = vunpack.c.l.b16 %v773
    %v1101 = vunpack.c.h.b16 %v773
    %v1102 = vunpack.c.l.b16 %v774
    %v1103 = vunpack.c.h.b16 %v774
    %v1104 = vunpack.c.l.b16 %v775
    %v1105 = vunpack.c.h.b16 %v775
    %v1106 = vunpack.c.l.b16 %v776
    %v1107 = vunpack.c.h.b16 %v776
    %v1108 = vunpack.c.l.b16 %v777
    %v1109 = vunpack.c.h.b16 %v777
    %v1110 = vunpack.c.l.b16 %v778
    %v1111 = vunpack.c.h.b16 %v778
    %v1112 = vunpack.c.l.b16 %v779
    %v1113 = vunpack.c.h.b16 %v779
    %v1114 = vunpack.c.l.b16 %v780
    %v1115 = vunpack.c.h.b16 %v780
    %v1116 = vunpack.c.l.b16 %v781
    %v1117 = vunpack.c.h.b16 %v781
    %v1118 = vunpack.c.l.b16 %v782
    %v1119 = vunpack.c.h.b16 %v782
    %v1120 = vunpack.c.l.b16 %v783
    %v1121 = vunpack.c.h.b16 %v783
    %v1122 = vunpack.c.l.b16 %v784
    %v1123 = vunpack.c.h.b16 %v784
    %v1124 = vunpack.c.l.b16 %v785
    %v1125 = vunpack.c.h.b16 %v785
    %v1126 = vunpack.c.l.b16 %v786
    %v1127 = vunpack.c.h.b16 %v786
    %v1128 = vunpack.c.l.b16 %v787
    %v1129 = vunpack.c.h.b16 %v787
    %v1130 = vunpack.c.l.b16 %v788
    %v1131 = vunpack.c.h.b16 %v788
    %v1132 = vunpack.c.l.b16 %v789
    %v1133 = vunpack.c.h.b16 %v789
    %v1134 = vunpack.c.l.b16 %v790
    %v1135 = vunpack.c.h.b16 %v790
    %v1136 = vunpack.c.l.b16 %v791
    %v1137 = vunpack.c.h.b16 %v791
    %v1138 = vunpack.c.l.b16 %v792
    %v1139 = vunpack.c.h.b16 %v792
    %v1140 = vunpack.c.l.b16 %v793
    %v1141 = vunpack.c.h.b16 %v793
    %v1142 = vunpack.c.l.b16 %v794
    %v1143 = vunpack.c.h.b16 %v794
    %v1144 = vunpack.c.l.b16 %v795
    %v1145 = vunpack.c.h.b16 %v795
    %v1146 = vunpack.c.l.b16 %v796
    %v1147 = vunpack.c.h.b16 %v796
    %v1148 = vunpack.c.l.b16 %v797
    %v1149 = vunpack.c.h.b16 %v797
    %v1150 = vunpack.c.l.b16 %v798
    %v1151 = vunpack.c.h.b16 %v798
    %v1152 = vunpack.c.l.b16 %v799
    %v1153 = vunpack.c.h.b16 %v799
    %v1154 = vunpack.c.l.b16 %v800
    %v1155 = vunpack.c.h.b16 %v800
    %v1156 = vunpack.c.l.b16 %v801
    %v1157 = vunpack.c.h.b16 %v801
    %v1158 = vunpack.c.l.b16 %v802
    %v1159 = vunpack.c.h.b16 %v802
    %v1160 = vunpack.c.l.b16 %v803
    %v1161 = vunpack.c.h.b16 %v803
    %v1162 = vunpack.c.l.b16 %v804
    %v1163 = vunpack.c.h.b16 %v804
    %v1164 = vunpack.c.l.b16 %v805
    %v1165 = vunpack.c.h.b16 %v805
    %v1166 = vunpack.c.l.b16 %v806
    %v1167 = vunpack.c.h.b16 %v806
    %v1168 = vunpack.c.l.b16 %v807
    %v1169 = vunpack.c.h.b16 %v807
    %v1170 = vunpack.c.l.b16 %v808
    %v1171 = vunpack.c.h.b16 %v808
    %v1172 = vunpack.c.l.b16 %v809
    %v1173 = vunpack.c.h.b16 %v809
    %v1174 = vunpack.c.l.b16 %v810
    %v1175 = vunpack.c.h.b16 %v810
    %v1176 = vunpack.c.l.b16 %v811
    %v1177 = vunpack.c.h.b16 %v811
    %v1178 = vunpack.c.l.b16 %v812
    %v1179 = vunpack.c.h.b16 %v812
    %v1180 = vunpack.c.l.b16 %v813
    %v1181 = vunpack.c.h.b16 %v813
    %v1182 = vunpack.c.l.b16 %v814
    %v1183 = vunpack.c.h.b16 %v814
    %v1184 = vunpack.c.l.b16 %v815
    %v1185 = vunpack.c.h.b16 %v815
    %v1186 = vunpack.c.l.b16 %v816
    %v1187 = vunpack.c.h.b16 %v816
    %v1188 = vunpack.c.l.b16 %v817
    %v1189 = vunpack.c.h.b16 %v817
    %v1190 = vunpack.c.l.b16 %v818
    %v1191 = vunpack.c.h.b16 %v818
    %v1192 = vunpack.c.l.b16 %v819
    %v1193 = vunpack.c.h.b16 %v819
    %v1194 = vunpack.c.l.b16 %v820
    %v1195 = vunpack.c.h.b16 %v820
    %v1196 = vunpack.c.l.b16 %v821
    %v1197 = vunpack.c.h.b16 %v821
    %v1198 = vunpack.c.l.b16 %v822
    %v1199 = vunpack.c.h.b16 %v822
    %v1200 = vunpack.c.l.b16 %v823
    %v1201 = vunpack.c.h.b16 %v823
    %v1202 = vunpack.c.l.b16 %v824
    %v1203 = vunpack.c.h.b16 %v824
    %v1204 = vunpack.c.l.b16 %v825
    %v1205 = vunpack.c.h.b16 %v825
    %v1206 = vunpack.c.l.b16 %v826
    %v1207 = vunpack.c.h.b16 %v826
    %v1208 = vunpack.c.l.b16 %v827
    %v1209 = vunpack.c.h.b16 %v827
    %v1210 = vunpack.c.l.b16 %v828
    %v1211 = vunpack.c.h.b16 %v828
    %v1212 = vunpack.c.l.b16 %v829
    %v1213 = vunpack.c.h.b16 %v829
    %v1214 = vunpack.c.l.b16 %v830
    %v1215 = vunpack.c.h.b16 %v830
    %v1216 = vunpack.c.l.b16 %v831
    %v1217 = vunpack.c.h.b16 %v831
    %v1218 = vunpack.c.l.b16 %v832
    %v1219 = vunpack.c.h.b16 %v832
    %v1220 = vunpack.c.l.b16 %v833
    %v1221 = vunpack.c.h.b16 %v833
    %v1222 = vunpack.c.l.b16 %v834
    %v1223 = vunpack.c.h.b16 %v834
    %v1224 = vunpack.c.l.b16 %v835
    %v1225 = vunpack.c.h.b16 %v835
    %v1226 = vunpack.c.l.b16 %v836
    %v1227 = vunpack.c.h.b16 %v836
    %v1228 = vunpack.c.l.b16 %v837
    %v1229 = vunpack.c.h.b16 %v837
    %v1230 = vunpack.c.l.b16 %v838
    %v1231 = vunpack.c.h.b16 %v838
    %v1232 = vunpack.c.l.b16 %v839
    %v1233 = vunpack.c.h.b16 %v839
    %v1234 = vunpack.c.l.b16 %v840
    %v1235 = vunpack.c.h.b16 %v840
    %v1236 = vunpack.c.l.b16 %v841
    %v1237 = vunpack.c.h.b16 %v841
    %v1238 = vpack.c.b16 %v984, %v982
    %v1239 = vpack.c.b16 %v985, %v983
    %v1240 = vpack.c.b16 %v988, %v986
    %v1241 = vpack.c.b16 %v989, %v987
    %v1242 = vpack.c.b16 %v992, %v990
    %v1243 = vpack.c.b16 %v993, %v991
    %v1244 = vpack.c.b16 %v996, %v994
    %v1245 = vpack.c.b16 %v997, %v995
    %v1246 = vpack.c.b16 %v1000, %v998
    %v1247 = vpack.c.b16 %v1001, %v999
    %v1248 = vpack.c.b16 %v1004, %v1002
    %v1249 = vpack.c.b16 %v1005, %v1003
    %v1250 = vpack.c.b16 %v1008, %v1006
    %v1251 = vpack.c.b16 %v1009, %v1007
    %v1252 = vpack.c.b16 %v1012, %v1010
    %v1253 = vpack.c.b16 %v1013, %v1011
    %v1254 = vpack.c.b16 %v1016, %v1014
    %v1255 = vpack.c.b16 %v1017, %v1015
    %v1256 = vpack.c.b16 %v1020, %v1018
    %v1257 = vpack.c.b16 %v1021, %v1019
    %v1258 = vpack.c.b16 %v1024, %v1022
    %v1259 = vpack.c.b16 %v1025, %v1023
    %v1260 = vpack.c.b16 %v1028, %v1026
    %v1261 = vpack.c.b16 %v1029, %v1027
    %v1262 = vpack.c.b16 %v1032, %v1030
    %v1263 = vpack.c.b16 %v1033, %v1031
    %v1264 = vpack.c.b16 %v1036, %v1034
    %v1265 = vpack.c.b16 %v1037, %v1035
    %v1266 = vpack.c.b16 %v1040, %v1038
    %v1267 = vpack.c.b16 %v1041, %v1039
    %v1268 = vpack.c.b16 %v1044, %v1042
    %v1269 = vpack.c.b16 %v1045, %v1043
    %v1270 = vpack.c.b16 %v1048, %v1046
    %v1271 = vpack.c.b16 %v1049, %v1047
    %v1272 = vpack.c.b16 %v1052, %v1050
    %v1273 = vpack.c.b16 %v1053, %v1051
    %v1274 = vpack.c.b16 %v1056, %v1054
    %v1275 = vpack.c.b16 %v1057, %v1055
    %v1276 = vpack.c.b16 %v1060, %v1058
    %v1277 = vpack.c.b16 %v1061, %v1059
    %v1278 = vpack.c.b16 %v1064, %v1062
    %v1279 = vpack.c.b16 %v1065, %v1063
    %v1280 = vpack.c.b16 %v1068, %v1066
    %v1281 = vpack.c.b16 %v1069, %v1067
    %v1282 = vpack.c.b16 %v1072, %v1070
    %v1283 = vpack.c.b16 %v1073, %v1071
    %v1284 = vpack.c.b16 %v1076, %v1074
    %v1285 = vpack.c.b16 %v1077, %v1075
    %v1286 = vpack.c.b16 %v1080, %v1078
    %v1287 = vpack.c.b16 %v1081, %v1079
    %v1288 = vpack.c.b16 %v1084, %v1082
    %v1289 = vpack.c.b16 %v1085, %v1083
    %v1290 = vpack.c.b16 %v1088, %v1086
    %v1291 = vpack.c.b16 %v1089, %v1087
    %v1292 = vpack.c.b16 %v1092, %v1090
    %v1293 = vpack.c.b16 %v1093, %v1091
    %v1294 = vpack.c.b16 %v1096, %v1094
    %v1295 = vpack.c.b16 %v1097, %v1095
    %v1296 = vpack.c.b16 %v1100, %v1098
    %v1297 = vpack.c.b16 %v1101, %v1099
    %v1298 = vpack.c.b16 %v1104, %v1102
    %v1299 = vpack.c.b16 %v1105, %v1103
    %v1300 = vpack.c.b16 %v1108, %v1106
    %v1301 = vpack.c.b16 %v1109, %v1107
    %v1302 = vpack.c.b16 %v1112, %v1110
    %v1303 = vpack.c.b16 %v1113, %v1111
    %v1304 = vpack.c.b16 %v1116, %v1114
    %v1305 = vpack.c.b16 %v1117, %v1115
    %v1306 = vpack.c.b16 %v1120, %v1118
    %v1307 = vpack.c.b16 %v1121, %v1119
    %v1308 = vpack.c.b16 %v1124, %v1122
    %v1309 = vpack.c.b16 %v1125, %v1123
    %v1310 = vpack.c.b16 %v1128, %v1126
    %v1311 = vpack.c.b16 %v1129, %v1127
    %v1312 = vpack.c.b16 %v1132, %v1130
    %v1313 = vpack.c.b16 %v1133, %v1131
    %v1314 = vpack.c.b16 %v1136, %v1134
    %v1315 = vpack.c.b16 %v1137, %v1135
    %v1316 = vpack.c.b16 %v1140, %v1138
    %v1317 = vpack.c.b16 %v1141, %v1139
    %v1318 = vpack.c.b16 %v1144, %v1142
    %v1319 = vpack.c.b16 %v1145, %v1143
    %v1320 = vpack.c.b16 %v1148, %v1146
    %v1321 = vpack.c.b16 %v1149, %v1147
    %v1322 = vpack.c.b16 %v1152, %v1150
    %v1323 = vpack.c.b16 %v1153, %v1151
    %v1324 = vpack.c.b16 %v1156, %v1154
    %v1325 = vpack.c.b16 %v1157, %v1155
    %v1326 = vpack.c.b16 %v1160, %v1158
    %v1327 = vpack.c.b16 %v1161, %v1159
    %v1328 = vpack.c.b16 %v1164, %v1162
    %v1329 = vpack.c.b16 %v1165, %v1163
    %v1330 = vpack.c.b16 %v1168, %v1166
    %v1331 = vpack.c.b16 %v1169, %v1167
    %v1332 = vpack.c.b16 %v1172, %v1170
    %v1333 = vpack.c.b16 %v1173, %v1171
    %v1334 = vpack.c.b16 %v1176, %v1174
    %v1335 = vpack.c.b16 %v1177, %v1175
    %v1336 = vpack.c.b16 %v1180, %v1178
    %v1337 = vpack.c.b16 %v1181, %v1179
    %v1338 = vpack.c.b16 %v1184, %v1182
    %v1339 = vpack.c.b16 %v1185, %v1183
    %v1340 = vpack.c.b16 %v1188, %v1186
    %v1341 = vpack.c.b16 %v1189, %v1187
    %v1342 = vpack.c.b16 %v1192, %v1190
    %v1343 = vpack.c.b16 %v1193, %v1191
    %v1344 = vpack.c.b16 %v1196, %v1194
    %v1345 = vpack.c.b16 %v1197, %v1195
    %v1346 = vpack.c.b16 %v1200, %v1198
    %v1347 = vpack.c.b16 %v1201, %v1199
    %v1348 = vpack.c.b16 %v1204, %v1202
    %v1349 = vpack.c.b16 %v1205, %v1203
    %v1350 = vpack.c.b16 %v1208, %v1206
    %v1351 = vpack.c.b16 %v1209, %v1207
    %v1352 = vpack.c.b16 %v1212, %v1210
    %v1353 = vpack.c.b16 %v1213, %v1211
    %v1354 = vpack.c.b16 %v1216, %v1214
    %v1355 = vpack.c.b16 %v1217, %v1215
    %v1356 = vpack.c.b16 %v1220, %v1218
    %v1357 = vpack.c.b16 %v1221, %v1219
    %v1358 = vpack.c.b16 %v1224, %v1222
    %v1359 = vpack.c.b16 %v1225, %v1223
    %v1360 = vpack.c.b16 %v1228, %v1226
    %v1361 = vpack.c.b16 %v1229, %v1227
    %v1362 = vpack.c.b16 %v1232, %v1230
    %v1363 = vpack.c.b16 %v1233, %v1231
    %v1364 = vpack.c.b16 %v1236, %v1234
    %v1365 = vpack.c.b16 %v1237, %v1235
    %1494 = vmatprep.subr.bf16.mxu0 %v1253
    %1495 = vmatpush1.bf16.msra.mxu0 %v1252
    %1496 = vmatprep.subr.bf16.mxu0 %v1251
    %1497 = vmatpush1.bf16.msra.mxu0 %v1250
    %1498 = vmatprep.subr.bf16.mxu0 %v1249
    %1499 = vmatpush1.bf16.msra.mxu0 %v1248
    %1500 = vmatprep.subr.bf16.mxu0 %v1247
    %1501 = vmatpush1.bf16.msra.mxu0 %v1246
    %1502 = vmatprep.subr.bf16.mxu0 %v1245
    %1503 = vmatpush1.bf16.msra.mxu0 %v1244
    %1504 = vmatprep.subr.bf16.mxu0 %v1243
    %1505 = vmatpush1.bf16.msra.mxu0 %v1242
    %1506 = vmatprep.subr.bf16.mxu0 %v1241
    %1507 = vmatpush1.bf16.msra.mxu0 %v1240
    %1508 = vmatprep.subr.bf16.mxu0 %v1239
    %1509 = vmatpush1.bf16.msra.mxu0 %v1238
    %1510 = vmatprep.subr.bf16.mxu0 %v1269
    %1511 = vmatpush2.bf16.msra.mxu0 %v1268
    %1512 = vmatprep.subr.bf16.mxu0 %v1267
    %1513 = vmatpush2.bf16.msra.mxu0 %v1266
    %1514 = vmatprep.subr.bf16.mxu0 %v1265
    %1515 = vmatpush2.bf16.msra.mxu0 %v1264
    %1516 = vmatprep.subr.bf16.mxu0 %v1263
    %1517 = vmatpush2.bf16.msra.mxu0 %v1262
    %1518 = vmatprep.subr.bf16.mxu0 %v1261
    %1519 = vmatpush2.bf16.msra.mxu0 %v1260
    %1520 = vmatprep.subr.bf16.mxu0 %v1259
    %1521 = vmatpush2.bf16.msra.mxu0 %v1258
    %1522 = vmatprep.subr.bf16.mxu0 %v1257
    %1523 = vmatpush2.bf16.msra.mxu0 %v1256
    %1524 = vmatprep.subr.bf16.mxu0 %v1255
    %1525 = vmatpush2.bf16.msra.mxu0 %v1254
    %1526 = vmatprep.mubr.bf16.mxu0 %v707
    %1527 = vmatmul.mubr.bf16.gmra.mxu0 %v706
    %v1528 = vpop.f32.mrf.mxu0
    %v1529 = vadd.f32 %v847, %v1528
    %v1530 = vpop.f32.mrf.mxu0
    %v1531 = vadd.f32 %v851, %v1530
    %v1532 = vpop.f32.mrf.mxu0
    %v1533 = vpop.f32.mrf.mxu0
    %1534 = vdwg.mxu0
    %1535 = vmatprep.subr.bf16.mxu0 %v1285
    %1536 = vmatpush1.bf16.msra.mxu0 %v1284
    %1537 = vmatprep.subr.bf16.mxu0 %v1283
    %1538 = vmatpush1.bf16.msra.mxu0 %v1282
    %1539 = vmatprep.subr.bf16.mxu0 %v1281
    %1540 = vmatpush1.bf16.msra.mxu0 %v1280
    %1541 = vmatprep.subr.bf16.mxu0 %v1279
    %1542 = vmatpush1.bf16.msra.mxu0 %v1278
    %1543 = vmatprep.subr.bf16.mxu0 %v1277
    %1544 = vmatpush1.bf16.msra.mxu0 %v1276
    %1545 = vmatprep.subr.bf16.mxu0 %v1275
    %1546 = vmatpush1.bf16.msra.mxu0 %v1274
    %1547 = vmatprep.subr.bf16.mxu0 %v1273
    %1548 = vmatpush1.bf16.msra.mxu0 %v1272
    %1549 = vmatprep.subr.bf16.mxu0 %v1271
    %1550 = vmatpush1.bf16.msra.mxu0 %v1270
    %1551 = vmatprep.subr.bf16.mxu0 %v1301
    %1552 = vmatpush2.bf16.msra.mxu0 %v1300
    %1553 = vmatprep.subr.bf16.mxu0 %v1299
    %1554 = vmatpush2.bf16.msra.mxu0 %v1298
    %1555 = vmatprep.subr.bf16.mxu0 %v1297
    %1556 = vmatpush2.bf16.msra.mxu0 %v1296
    %1557 = vmatprep.subr.bf16.mxu0 %v1295
    %1558 = vmatpush2.bf16.msra.mxu0 %v1294
    %1559 = vmatprep.subr.bf16.mxu0 %v1293
    %1560 = vmatpush2.bf16.msra.mxu0 %v1292
    %1561 = vmatprep.subr.bf16.mxu0 %v1291
    %1562 = vmatpush2.bf16.msra.mxu0 %v1290
    %1563 = vmatprep.subr.bf16.mxu0 %v1289
    %1564 = vmatpush2.bf16.msra.mxu0 %v1288
    %1565 = vmatprep.subr.bf16.mxu0 %v1287
    %1566 = vmatpush2.bf16.msra.mxu0 %v1286
    %1567 = vmatprep.mubr.bf16.mxu0 %v709
    %1568 = vmatmul.mubr.bf16.gmra.mxu0 %v708
    %v1569 = vpop.f32.mrf.mxu0
    %v1570 = vadd.f32 %v1529, %v1569
    %v1571 = vpop.f32.mrf.mxu0
    %v1572 = vadd.f32 %v1531, %v1571
    %v1573 = vpop.f32.mrf.mxu0
    %v1574 = vpop.f32.mrf.mxu0
    %1575 = vdwg.mxu0
    %1576 = vmatprep.subr.bf16.mxu0 %v1317
    %1577 = vmatpush1.bf16.msra.mxu0 %v1316
    %1578 = vmatprep.subr.bf16.mxu0 %v1315
    %1579 = vmatpush1.bf16.msra.mxu0 %v1314
    %1580 = vmatprep.subr.bf16.mxu0 %v1313
    %1581 = vmatpush1.bf16.msra.mxu0 %v1312
    %1582 = vmatprep.subr.bf16.mxu0 %v1311
    %1583 = vmatpush1.bf16.msra.mxu0 %v1310
    %1584 = vmatprep.subr.bf16.mxu0 %v1309
    %1585 = vmatpush1.bf16.msra.mxu0 %v1308
    %1586 = vmatprep.subr.bf16.mxu0 %v1307
    %1587 = vmatpush1.bf16.msra.mxu0 %v1306
    %1588 = vmatprep.subr.bf16.mxu0 %v1305
    %1589 = vmatpush1.bf16.msra.mxu0 %v1304
    %1590 = vmatprep.subr.bf16.mxu0 %v1303
    %1591 = vmatpush1.bf16.msra.mxu0 %v1302
    %1592 = vmatprep.subr.bf16.mxu0 %v1333
    %1593 = vmatpush2.bf16.msra.mxu0 %v1332
    %1594 = vmatprep.subr.bf16.mxu0 %v1331
    %1595 = vmatpush2.bf16.msra.mxu0 %v1330
    %1596 = vmatprep.subr.bf16.mxu0 %v1329
    %1597 = vmatpush2.bf16.msra.mxu0 %v1328
    %1598 = vmatprep.subr.bf16.mxu0 %v1327
    %1599 = vmatpush2.bf16.msra.mxu0 %v1326
    %1600 = vmatprep.subr.bf16.mxu0 %v1325
    %1601 = vmatpush2.bf16.msra.mxu0 %v1324
    %1602 = vmatprep.subr.bf16.mxu0 %v1323
    %1603 = vmatpush2.bf16.msra.mxu0 %v1322
    %1604 = vmatprep.subr.bf16.mxu0 %v1321
    %1605 = vmatpush2.bf16.msra.mxu0 %v1320
    %1606 = vmatprep.subr.bf16.mxu0 %v1319
    %1607 = vmatpush2.bf16.msra.mxu0 %v1318
    %1608 = vmatprep.mubr.bf16.mxu0 %v711
    %1609 = vmatmul.mubr.bf16.gmra.mxu0 %v710
    %v1610 = vpop.f32.mrf.mxu0
    %v1611 = vadd.f32 %v1570, %v1610
    %v1612 = vpop.f32.mrf.mxu0
    %v1613 = vadd.f32 %v1572, %v1612
    %v1614 = vpop.f32.mrf.mxu0
    %v1615 = vpop.f32.mrf.mxu0
    %1616 = vdwg.mxu0
    %1617 = vmatprep.subr.bf16.mxu0 %v1349
    %1618 = vmatpush1.bf16.msra.mxu0 %v1348
    %1619 = vmatprep.subr.bf16.mxu0 %v1347
    %1620 = vmatpush1.bf16.msra.mxu0 %v1346
    %1621 = vmatprep.subr.bf16.mxu0 %v1345
    %1622 = vmatpush1.bf16.msra.mxu0 %v1344
    %1623 = vmatprep.subr.bf16.mxu0 %v1343
    %1624 = vmatpush1.bf16.msra.mxu0 %v1342
    %1625 = vmatprep.subr.bf16.mxu0 %v1341
    %1626 = vmatpush1.bf16.msra.mxu0 %v1340
    %1627 = vmatprep.subr.bf16.mxu0 %v1339
    %1628 = vmatpush1.bf16.msra.mxu0 %v1338
    %1629 = vmatprep.subr.bf16.mxu0 %v1337
    %1630 = vmatpush1.bf16.msra.mxu0 %v1336
    %1631 = vmatprep.subr.bf16.mxu0 %v1335
    %1632 = vmatpush1.bf16.msra.mxu0 %v1334
    %1633 = vmatprep.subr.bf16.mxu0 %v1365
    %1634 = vmatpush2.bf16.msra.mxu0 %v1364
    %1635 = vmatprep.subr.bf16.mxu0 %v1363
    %1636 = vmatpush2.bf16.msra.mxu0 %v1362
    %1637 = vmatprep.subr.bf16.mxu0 %v1361
    %1638 = vmatpush2.bf16.msra.mxu0 %v1360
    %1639 = vmatprep.subr.bf16.mxu0 %v1359
    %1640 = vmatpush2.bf16.msra.mxu0 %v1358
    %1641 = vmatprep.subr.bf16.mxu0 %v1357
    %1642 = vmatpush2.bf16.msra.mxu0 %v1356
    %1643 = vmatprep.subr.bf16.mxu0 %v1355
    %1644 = vmatpush2.bf16.msra.mxu0 %v1354
    %1645 = vmatprep.subr.bf16.mxu0 %v1353
    %1646 = vmatpush2.bf16.msra.mxu0 %v1352
    %1647 = vmatprep.subr.bf16.mxu0 %v1351
    %1648 = vmatpush2.bf16.msra.mxu0 %v1350
    %1649 = vmatprep.mubr.bf16.mxu0 %v713
    %1650 = vmatmul.mubr.bf16.gmra.mxu0 %v712
    %v1651 = vpop.f32.mrf.mxu0
    %v1652 = vadd.f32 %v1611, %v1651
    %v1653 = vpop.f32.mrf.mxu0
    %v1654 = vadd.f32 %v1613, %v1653
    %v1655 = vpop.f32.mrf.mxu0
    %v1656 = vpop.f32.mrf.mxu0
    %1657 = vdwg.mxu0
    %v1658 = vmax.f32 %v1652, 0.0
    %v1659 = vmax.f32 %v1654, 0.0
    %v1660 = vpack.c.bf16 %v1658, %v1658
    %v1661 = vpack.c.bf16 %v1659, %v1659
    %v1662 = vld [vmem:[%s5] sm:$0xf]
    %v1663 = vld [vmem:[%s5 + $0x4] sm:$0xf]
    %v1664 = vld [vmem:[%s5 + $0x8] sm:$0xf]
    %v1665 = vld [vmem:[%s5 + $0xc] sm:$0xf]
    %v1666 = vld [vmem:[%s5 + $0x10] sm:$0xf]
    %v1667 = vld [vmem:[%s5 + $0x14] sm:$0xf]
    %v1668 = vld [vmem:[%s5 + $0x18] sm:$0xf]
    %v1669 = vld [vmem:[%s5 + $0x1c] sm:$0xf]
    %v1670 = vld [vmem:[%s5 + $0x20] sm:$0xf]
    %v1671 = vld [vmem:[%s5 + $0x24] sm:$0xf]
    %v1672 = vld [vmem:[%s5 + $0x28] sm:$0xf]
    %v1673 = vld [vmem:[%s5 + $0x2c] sm:$0xf]
    %v1674 = vld [vmem:[%s5 + $0x30] sm:$0xf]
    %v1675 = vld [vmem:[%s5 + $0x34] sm:$0xf]
    %v1676 = vld [vmem:[%s5 + $0x38] sm:$0xf]
    %v1677 = vld [vmem:[%s5 + $0x3c] sm:$0xf]
    %v1678 = vld [vmem:[%s5 + $0x40] sm:$0xf]
    %v1679 = vld [vmem:[%s5 + $0x44] sm:$0xf]
    %v1680 = vld [vmem:[%s5 + $0x48] sm:$0xf]
    %v1681 = vld [vmem:[%s5 + $0x4c] sm:$0xf]
    %v1682 = vld [vmem:[%s5 + $0x50] sm:$0xf]
    %v1683 = vld [vmem:[%s5 + $0x54] sm:$0xf]
    %v1684 = vld [vmem:[%s5 + $0x58] sm:$0xf]
    %v1685 = vld [vmem:[%s5 + $0x5c] sm:$0xf]
    %v1686 = vld [vmem:[%s5 + $0x60] sm:$0xf]
    %v1687 = vld [vmem:[%s5 + $0x64] sm:$0xf]
    %v1688 = vld [vmem:[%s5 + $0x68] sm:$0xf]
    %v1689 = vld [vmem:[%s5 + $0x6c] sm:$0xf]
    %v1690 = vld [vmem:[%s5 + $0x70] sm:$0xf]
    %v1691 = vld [vmem:[%s5 + $0x74] sm:$0xf]
    %v1692 = vld [vmem:[%s5 + $0x78] sm:$0xf]
    %v1693 = vld [vmem:[%s5 + $0x7c] sm:$0xf]
    %v1694 = vld [vmem:[%s6] sm:$0x1]
    %v1696 = vlaneseq
    %v1697 = vshrl.u32 %v1696, 7
    %v1698 = vsub.s32 0, %v1697
    %v1699 = vrot.slane %v1694, %v1698
    %v1733 = vunpack.c.l.b16 %v1662
    %v1734 = vunpack.c.l.b16 %v1663
    %v1735 = vunpack.c.l.b16 %v1664
    %v1736 = vunpack.c.l.b16 %v1665
    %v1737 = vunpack.c.l.b16 %v1666
    %v1738 = vunpack.c.l.b16 %v1667
    %v1739 = vunpack.c.l.b16 %v1668
    %v1740 = vunpack.c.l.b16 %v1669
    %v1741 = vunpack.c.l.b16 %v1670
    %v1742 = vunpack.c.l.b16 %v1671
    %v1743 = vunpack.c.l.b16 %v1672
    %v1744 = vunpack.c.l.b16 %v1673
    %v1745 = vunpack.c.l.b16 %v1674
    %v1746 = vunpack.c.l.b16 %v1675
    %v1747 = vunpack.c.l.b16 %v1676
    %v1748 = vunpack.c.l.b16 %v1677
    %v1749 = vunpack.c.l.b16 %v1678
    %v1750 = vunpack.c.l.b16 %v1679
    %v1751 = vunpack.c.l.b16 %v1680
    %v1752 = vunpack.c.l.b16 %v1681
    %v1753 = vunpack.c.l.b16 %v1682
    %v1754 = vunpack.c.l.b16 %v1683
    %v1755 = vunpack.c.l.b16 %v1684
    %v1756 = vunpack.c.l.b16 %v1685
    %v1757 = vunpack.c.l.b16 %v1686
    %v1758 = vunpack.c.l.b16 %v1687
    %v1759 = vunpack.c.l.b16 %v1688
    %v1760 = vunpack.c.l.b16 %v1689
    %v1761 = vunpack.c.l.b16 %v1690
    %v1762 = vunpack.c.l.b16 %v1691
    %v1763 = vunpack.c.l.b16 %v1692
    %v1764 = vunpack.c.l.b16 %v1693
    %v1765 = vpack.c.b16 %v1734, %v1733
    %v1766 = vpack.c.b16 %v1736, %v1735
    %v1767 = vpack.c.b16 %v1738, %v1737
    %v1768 = vpack.c.b16 %v1740, %v1739
    %v1769 = vpack.c.b16 %v1742, %v1741
    %v1770 = vpack.c.b16 %v1744, %v1743
    %v1771 = vpack.c.b16 %v1746, %v1745
    %v1772 = vpack.c.b16 %v1748, %v1747
    %v1773 = vpack.c.b16 %v1750, %v1749
    %v1774 = vpack.c.b16 %v1752, %v1751
    %v1775 = vpack.c.b16 %v1754, %v1753
    %v1776 = vpack.c.b16 %v1756, %v1755
    %v1777 = vpack.c.b16 %v1758, %v1757
    %v1778 = vpack.c.b16 %v1760, %v1759
    %v1779 = vpack.c.b16 %v1762, %v1761
    %v1780 = vpack.c.b16 %v1764, %v1763
    %1797 = vmatprep.subr.bf16.mxu0 0
    %1798 = vmatpush1.bf16.msra.mxu0 %v1772
    %1799 = vmatprep.subr.bf16.mxu0 0
    %1800 = vmatpush1.bf16.msra.mxu0 %v1771
    %1801 = vmatprep.subr.bf16.mxu0 0
    %1802 = vmatpush1.bf16.msra.mxu0 %v1770
    %1803 = vmatprep.subr.bf16.mxu0 0
    %1804 = vmatpush1.bf16.msra.mxu0 %v1769
    %1805 = vmatprep.subr.bf16.mxu0 0
    %1806 = vmatpush1.bf16.msra.mxu0 %v1768
    %1807 = vmatprep.subr.bf16.mxu0 0
    %1808 = vmatpush1.bf16.msra.mxu0 %v1767
    %1809 = vmatprep.subr.bf16.mxu0 0
    %1810 = vmatpush1.bf16.msra.mxu0 %v1766
    %1811 = vmatprep.subr.bf16.mxu0 0
    %1812 = vmatpush1.bf16.msra.mxu0 %v1765
    %1813 = vmatprep.subr.bf16.mxu0 0
    %1814 = vmatpush2.bf16.msra.mxu0 %v1780
    %1815 = vmatprep.subr.bf16.mxu0 0
    %1816 = vmatpush2.bf16.msra.mxu0 %v1779
    %1817 = vmatprep.subr.bf16.mxu0 0
    %1818 = vmatpush2.bf16.msra.mxu0 %v1778
    %1819 = vmatprep.subr.bf16.mxu0 0
    %1820 = vmatpush2.bf16.msra.mxu0 %v1777
    %1821 = vmatprep.subr.bf16.mxu0 0
    %1822 = vmatpush2.bf16.msra.mxu0 %v1776
    %1823 = vmatprep.subr.bf16.mxu0 0
    %1824 = vmatpush2.bf16.msra.mxu0 %v1775
    %1825 = vmatprep.subr.bf16.mxu0 0
    %1826 = vmatpush2.bf16.msra.mxu0 %v1774
    %1827 = vmatprep.subr.bf16.mxu0 0
    %1828 = vmatpush2.bf16.msra.mxu0 %v1773
    %1829 = vmatprep.mubr.bf16.mxu0 %v1661
    %1830 = vmatmul.mubr.bf16.gmra.mxu0 %v1660
    %v1831 = vpop.f32.mrf.mxu0
    %v1832 = vadd.f32 %v1699, %v1831
    %v1833 = vpop.f32.mrf.mxu0
    %v1834 = vpop.f32.mrf.mxu0
    %v1835 = vpop.f32.mrf.mxu0
    %1836 = vdwg.mxu0
    %vm1837 = vcmask 58368
    %v1838 = vsel %vm1837, %v1832, -inf
    %1839 = vmax.xlane.f32.xlu0 %v1838
    %v1840 = vpop.xlane.xlu0 %1839
    %v1841 = vsub.f32 %v1832, %v1840
    %v1842 = vmul.f32 %v1841, 1.442695
    %v1843 = vpow.pop %v1842
    %v1844 = vsel %vm1837, %v1843, 0.0
    %1845 = vadd.xlane.f32.xlu0 %v1844
    %v1846 = vpop.xlane.xlu0 %1845
    %v1847 = vrcp.pop %v1846
    %v1848 = vmul.f32 %v1843, %v1847
    %1849 = vst.msk [vmem:[#allocation5] sm:$0x3] %vm1837, %v1848
    // Predicated region
    $region60: #{policy_forward.1} parent=1 // pred_check
      _
    $region61: #{policy_forward.1} parent=1 // pred_check_branch
      %1851 = sbr.rel (0) target = $region63
    $region62: #{policy_forward.1} parent=1 // pred_region
      %s1853 = ssub.s32 32, 32
      %1854 = vsyncadd [#allocation6], %s1853
      %s1856 = sshll.u32 [#allocation5], 4
      %s1857 = int_to_ptr.vmem [resolvable:$true] %s1856
      %1859 = dma.vmem_to_hbm [thread:$0]  %s1857, 32, %s7, [#allocation6]
    $region63: #{policy_forward.1} parent=1 // pred_fallthru
      _
    // Predicated region
    $region64: #{policy_forward.1} parent=1 // pred_check
      _
    $region65: #{policy_forward.1} parent=1 // pred_check_branch
      %1861 = sbr.rel (0) target = $region67
    $region66: #{policy_forward.1} parent=1 // pred_region
      %1862 = dma.done [#allocation6], 32
    $region67: #{policy_forward.1} parent=1 // pred_fallthru
      _
    %1863 = vsyncpa [#allocation6], 1
  %1864 = vsyncmov [#allocation4]
  %s1865 = vpop.sfrf %1864
  %p1866 = scmp.eq.s32.totalorder %s1865, 0
  %p1867 = pneg %p1866
  %1869 = shalt.err (%p1867)

</llo_original>
